<compile_context>
chip_gen: v7x
topology: tpu7x:2x2x1
jax: 0.10.0
libtpu: 0.0.40
codegen_flags: <defaults>
</compile_context>

<pallas_src>
import functools

import jax
import jax.numpy as jnp
from jax.experimental import pallas as pl
from jax.experimental.pallas import tpu as pltpu


def _round_up(x, m):
    return ((x + m - 1) // m) * m


def fused_gcn_kernel(x_hbm_ref, a_ref, w_ref, b_ref, invdeg_ref,
                     o_ref, agg_ref, copy_sem,
                     *, n_layers, n_classes, tile_k):
    """grid = (layer l, src-column tile k); one body call = one K tile of one layer.

    x_hbm_ref:  [N, F]          padded bf16 input features, left in HBM (pl.ANY)
    a_ref:      [1, N, tile_k]  int8 (0/1) slab of layer l's dense block adjacency
    w_ref:      [1, F, F]       bf16 padded GraphConv weight for layer l
    b_ref:      [1, 1, F]       f32 padded bias for layer l
    invdeg_ref: [1, N, 1]       f32 1/clamp(in_degree, 1) for layer l (host-precomputed)
    o_ref:      [N, F]          bf16 resident output block; doubles as inter-layer h
    agg_ref:    [N, F]          f32 VMEM accumulator for A @ h
    copy_sem:   DMA semaphore for the one-time x -> h seed copy
    """
    l = pl.program_id(0)
    k = pl.program_id(1)
    n_k = pl.num_programs(1)

    # One-time seed of the resident h buffer (o_ref) with the input features.
    @pl.when(jnp.logical_and(l == 0, k == 0))
    def _():
        cp = pltpu.make_async_copy(x_hbm_ref, o_ref, copy_sem)
        cp.start()
        cp.wait()

    @pl.when(k == 0)
    def _():
        agg_ref[...] = jnp.zeros_like(agg_ref)

    # Partial aggregation over this src-column tile: agg += A[:, k-tile] @ h[k-tile, :]
    a = a_ref[0].astype(jnp.bfloat16)                     # [N, tile_k], exact for 0/1
    start = pl.multiple_of(k * tile_k, tile_k)
    h_k = o_ref[pl.ds(start, tile_k), :]                  # [tile_k, F] bf16 (no cast needed)
    agg_ref[...] += jnp.dot(a, h_k, preferred_element_type=jnp.float32)

    @pl.when(k == n_k - 1)
    def _():
        # norm='right': divide aggregated messages by clamped dst in-degree,
        # then the feature transform.  Zero-in-degree rows stay zero (inv_deg = 1).
        agg = agg_ref[...] * invdeg_ref[0]                # [N, F] f32
        out = jnp.dot(agg.astype(jnp.bfloat16), w_ref[0],
                      preferred_element_type=jnp.float32) + b_ref[0]

        @pl.when(l < n_layers - 1)
        def _():
            o_ref[...] = jnp.maximum(out, 0.0).astype(o_ref.dtype)   # ReLU, stays in VMEM

        @pl.when(l == n_layers - 1)
        def _():
            # Mask the zero-padded class columns, fused log_softmax (all f32), store bf16.
            col = jax.lax.broadcasted_iota(jnp.int32, out.shape, 1)
            logits = jnp.where(col < n_classes, out, -1e30)
            m = jnp.max(logits, axis=-1, keepdims=True)
            z = logits - m
            lse = jnp.log(jnp.sum(jnp.exp(z), axis=-1, keepdims=True))
            o_ref[...] = (z - lse).astype(o_ref.dtype)


def gcn_forward(blocks, x, params, n_classes, *, tile_k=None):
    """Mirrors GCN.forward for a stack of DGL sampled blocks given as dense adjacencies.

    blocks[l]: [n_dst_l, n_src_l] dense 0/1 adjacency (src -> dst), n_src_{l+1} == n_dst_l.
    x:         [n_src_0, in_feats] input node features.
    params[l]: (W [in_f, out_f], b [1, out_f]).
    Returns:   [n_dst_last, n_classes] f32 log-probabilities.
    """
    n_layers = len(blocks)

    node_counts = [blocks[0].shape[1]] + [a.shape[0] for a in blocks]
    n_pad = _round_up(max(node_counts), 128)
    feat_dims = [x.shape[1]] + [w.shape[1] for (w, _) in params]
    f_pad = _round_up(max(feat_dims), 128)
    # TODO(synk): pad (n_dst, n_src, f_in, f_out) per layer instead of one global (n_pad, f_pad)
    # so shrinking sampled blocks don't stream zero A columns / compute padded MXU flops.

    if tile_k is None:
        tile_k = next(t for t in (512, 384, 256, 128) if n_pad % t == 0)
    assert n_pad % tile_k == 0
    n_k = n_pad // tile_k

    # Zero-padded, stacked per-layer operands (binary A stored exactly in int8, W in bf16).
    a_stack = jnp.zeros((n_layers, n_pad, n_pad), jnp.int8)
    w_stack = jnp.zeros((n_layers, f_pad, f_pad), jnp.bfloat16)
    b_stack = jnp.zeros((n_layers, 1, f_pad), jnp.float32)
    invdeg_stack = jnp.ones((n_layers, n_pad, 1), jnp.float32)
    for l, (a, (w, b)) in enumerate(zip(blocks, params)):
        a_stack = a_stack.at[l, :a.shape[0], :a.shape[1]].set(a.astype(jnp.int8))
        w_stack = w_stack.at[l, :w.shape[0], :w.shape[1]].set(w.astype(jnp.bfloat16))
        b_stack = b_stack.at[l, :, :b.shape[1]].set(b)
        deg = jnp.sum(a.astype(jnp.float32), axis=-1, keepdims=True)   # [n_dst, 1]
        invdeg_stack = invdeg_stack.at[l, :a.shape[0], :].set(1.0 / jnp.maximum(deg, 1.0))
    x_pad = jnp.zeros((n_pad, f_pad), jnp.bfloat16)
    x_pad = x_pad.at[:x.shape[0], :x.shape[1]].set(x.astype(jnp.bfloat16))

    # VMEM budget: double-buffered pipelined inputs + resident buffers, with headroom.
    vmem_bytes = (
        2 * n_pad * tile_k * 1        # A k-tiles (int8, double-buffered)
        + 2 * f_pad * f_pad * 2       # W (bf16, double-buffered)
        + 2 * 8 * f_pad * 4           # bias (sublane-padded)
        + 2 * n_pad * 128 * 4         # inv_deg (lane-padded)
        + n_pad * f_pad * 2           # resident output / h (bf16)
        + n_pad * f_pad * 4           # agg accumulator (f32)
    )
    vmem_limit = int(min(vmem_bytes * 1.5 + (8 << 20), 128 * 1024 * 1024))

    kernel = functools.partial(fused_gcn_kernel, n_layers=n_layers,
                               n_classes=n_classes, tile_k=tile_k)
    out_pad = pl.pallas_call(
        kernel,
        out_shape=jax.ShapeDtypeStruct((n_pad, f_pad), jnp.bfloat16),
        grid_spec=pltpu.PrefetchScalarGridSpec(
            num_scalar_prefetch=0,
            grid=(n_layers, n_k),
            in_specs=[
                pl.BlockSpec(memory_space=pl.ANY),                          # x stays in HBM
                pl.BlockSpec((1, n_pad, tile_k), lambda l, k: (l, 0, k)),   # A_l k-tile
                pl.BlockSpec((1, f_pad, f_pad), lambda l, k: (l, 0, 0)),    # W_l
                pl.BlockSpec((1, 1, f_pad), lambda l, k: (l, 0, 0)),        # b_l
                pl.BlockSpec((1, n_pad, 1), lambda l, k: (l, 0, 0)),        # inv_deg_l
            ],
            out_specs=pl.BlockSpec((n_pad, f_pad), lambda l, k: (0, 0)),    # resident h/out
            scratch_shapes=[
                pltpu.VMEM((n_pad, f_pad), jnp.float32),   # A@h accumulator
                pltpu.SemaphoreType.DMA,                   # one-time x -> h copy
            ],
        ),
        compiler_params=pltpu.CompilerParams(
            dimension_semantics=("arbitrary", "arbitrary"),  # sequential deps through scratch
            vmem_limit_bytes=vmem_limit,
        ),
    )(x_pad, a_stack, w_stack, b_stack, invdeg_stack)

    n_dst_last = blocks[-1].shape[0]
    return out_pad[:n_dst_last, :n_classes].astype(jnp.float32)


if __name__ == "__main__":
    in_feats, n_hidden, n_classes, n_layers = 16, 32, 8, 3
    # Block sizes: src_{l+1} must equal dst_l (DGL sampled-block convention).
    src_sizes = [200, 160, 120]
    dst_sizes = [160, 120, 80]

    key = jax.random.PRNGKey(0)
    keys = jax.random.split(key, 2 * n_layers + 1)

    # Deterministic dense 0/1 block adjacencies.
    blocks = []
    for l in range(n_layers):
        a = (jax.random.uniform(keys[l], (dst_sizes[l], src_sizes[l])) < 0.2)
        blocks.append(a.astype(jnp.float32))

    # GraphConv params: Xavier-uniform weights, zero bias (deterministic).
    dims = [in_feats] + [n_hidden] * (n_layers - 1) + [n_classes]
    params = []
    for l in range(n_layers):
        fan_in, fan_out = dims[l], dims[l + 1]
        limit = (6.0 / (fan_in + fan_out)) ** 0.5
        w = jax.random.uniform(keys[n_layers + l], (fan_in, fan_out),
                               minval=-limit, maxval=limit, dtype=jnp.float32)
        b = jnp.zeros((1, fan_out), dtype=jnp.float32)
        params.append((w, b))

    # Input node features for the outermost block's source nodes.
    x = jax.random.normal(keys[-1], (src_sizes[0], in_feats), dtype=jnp.float32)

    # tile_k=128 with n_pad=256 exercises the K-tiled accumulation path (n_k=2).
    out = gcn_forward(blocks, x, params, n_classes, tile_k=128)
    out = jax.block_until_ready(out)
    assert out.shape == (dst_sizes[-1], n_classes)
    assert bool(jnp.all(jnp.isfinite(out)))

    # Pure-JAX f32 reference (loose tolerance: h / W / final output are bf16 in the kernel).
    def ref_forward(blocks, x, params):
        h = x
        for l, (a, (w, b)) in enumerate(zip(blocks, params)):
            deg = jnp.maximum(jnp.sum(a, axis=-1, keepdims=True), 1.0)
            h = ((a @ h) / deg) @ w + b
            if l < len(blocks) - 1:
                h = jax.nn.relu(h)
        return jax.nn.log_softmax(h, axis=-1)

    ref = ref_forward(blocks, x, params)
    max_err = float(jnp.max(jnp.abs(out - ref)))
    assert max_err < 0.1, max_err
    print("KERNEL_OK")
</pallas_src>

<mosaic_0001>
module attributes {stable_mosaic.version = 11 : i64} {
  func.func @fused_gcn_kernel(%arg0: i32, %arg1: i32, %arg2: memref<256x128xbf16, #tpu.memory_space<any>>, %arg3: memref<1x256x128xi8, #tpu.memory_space<vmem>>, %arg4: memref<1x128x128xbf16, #tpu.memory_space<vmem>>, %arg5: memref<1x1x128xf32, #tpu.memory_space<vmem>>, %arg6: memref<1x256x1xf32, #tpu.memory_space<vmem>>, %arg7: memref<256x128xbf16, #tpu.memory_space<vmem>>, %arg8: memref<256x128xf32, #tpu.memory_space<vmem>>, %arg9: memref<!tpu.dma_semaphore, #tpu.memory_space<semaphore_mem>>) attributes {dimension_semantics = [#tpu.dimension_semantics<arbitrary>, #tpu.dimension_semantics<arbitrary>], iteration_bounds = array<i64: 3, 2>, scalar_prefetch = 0 : i64, scratch_operands = 2 : i64, tpu.core_type = #tpu.core_type<tc>, window_params = [{}, {transform_indices = @transform_1, window_bounds = array<i64: 1, 256, 128>}, {transform_indices = @transform_2, window_bounds = array<i64: 1, 128, 128>}, {transform_indices = @transform_3, window_bounds = array<i64: 1, 1, 128>}, {transform_indices = @transform_4, window_bounds = array<i64: 1, 256, 1>}, {pipeline_mode = #tpu.pipeline_mode<synchronous>, transform_indices = @transform_5, window_bounds = array<i64: 256, 128>}]} {
    %c0_i32 = arith.constant 0 : i32
    %0 = arith.cmpi eq, %arg0, %c0_i32 : i32
    %c0_i32_0 = arith.constant 0 : i32
    %1 = arith.cmpi eq, %arg1, %c0_i32_0 : i32
    %2 = arith.andi %0, %1 : i1
    %3 = arith.extui %2 : i1 to i32
    %c0_i32_1 = arith.constant 0 : i32
    %4 = arith.cmpi ne, %3, %c0_i32_1 : i32
    scf.if %4 {
      tpu.enqueue_dma source(%arg2 : memref<256x128xbf16, #tpu.memory_space<any>>) target(%arg7 : memref<256x128xbf16, #tpu.memory_space<vmem>>) target_semaphore(%arg9 : memref<!tpu.dma_semaphore, #tpu.memory_space<semaphore_mem>>)
      tpu.wait_dma2 semaphore(%arg9 : memref<!tpu.dma_semaphore, #tpu.memory_space<semaphore_mem>>) src(%arg2 : memref<256x128xbf16, #tpu.memory_space<any>>) dst(%arg7 : memref<256x128xbf16, #tpu.memory_space<vmem>>)
    } else {
    }
    %c0_i32_2 = arith.constant 0 : i32
    %5 = arith.cmpi eq, %arg1, %c0_i32_2 : i32
    %6 = arith.extui %5 : i1 to i32
    %c0_i32_3 = arith.constant 0 : i32
    %7 = arith.cmpi ne, %6, %c0_i32_3 : i32
    scf.if %7 {
      %cst_12 = arith.constant 0.000000e+00 : f32
      %22 = vector.broadcast %cst_12 : f32 to vector<256x128xf32>
      %c0_13 = arith.constant 0 : index
      %c0_14 = arith.constant 0 : index
      %23 = vector.load %arg8[%c0_13, %c0_14] : memref<256x128xf32, #tpu.memory_space<vmem>>, vector<256x128xf32>
      tpu.vector_store %arg8[%c0_13, %c0_14], %22 {strides = array<i32>} : memref<256x128xf32, #tpu.memory_space<vmem>>, vector<256x128xf32>,
    } else {
    }
    %c0 = arith.constant 0 : index
    %c0_4 = arith.constant 0 : index
    %c0_5 = arith.constant 0 : index
    %8 = vector.load %arg3[%c0, %c0_4, %c0_5] : memref<1x256x128xi8, #tpu.memory_space<vmem>>, vector<1x256x128xi8>
    %9 = vector.shape_cast %8 : vector<1x256x128xi8> to vector<256x128xi8>
    %10 = arith.sitofp %9 : vector<256x128xi8> to vector<256x128xbf16>
    %c128_i32 = arith.constant 128 : i32
    %11 = arith.muli %arg1, %c128_i32 : i32
    %12 = tpu.assume_multiple %11, 128 : i32
    %13 = arith.index_cast %12 : i32 to index
    %c0_6 = arith.constant 0 : index
    %14 = vector.load %arg7[%13, %c0_6] : memref<256x128xbf16, #tpu.memory_space<vmem>>, vector<128x128xbf16>
    %c0_7 = arith.constant 0 : index
    %c0_8 = arith.constant 0 : index
    %15 = vector.load %arg8[%c0_7, %c0_8] : memref<256x128xf32, #tpu.memory_space<vmem>>, vector<256x128xf32>
    %cst = arith.constant dense<0.000000e+00> : vector<256x128xf32>
    %16 = tpu.matmul %10, %14, %cst {dimension_numbers = #tpu.dot_dimension_numbers<[1], [0], [0], [1], [0, 0, 1, 1], [], []>} : vector<256x128xbf16>, vector<128x128xbf16>, vector<256x128xf32> -> vector<256x128xf32>
    %17 = arith.addf %15, %16 : vector<256x128xf32>
    %c0_9 = arith.constant 0 : index
    %c0_10 = arith.constant 0 : index
    %18 = vector.load %arg8[%c0_9, %c0_10] : memref<256x128xf32, #tpu.memory_space<vmem>>, vector<256x128xf32>
    tpu.vector_store %arg8[%c0_9, %c0_10], %17 {strides = array<i32>} : memref<256x128xf32, #tpu.memory_space<vmem>>, vector<256x128xf32>,
    %c1_i32 = arith.constant 1 : i32
    %19 = arith.cmpi eq, %arg1, %c1_i32 : i32
    %20 = arith.extui %19 : i1 to i32
    %c0_i32_11 = arith.constant 0 : i32
    %21 = arith.cmpi ne, %20, %c0_i32_11 : i32
    scf.if %21 {
      %c0_12 = arith.constant 0 : index
      %c0_13 = arith.constant 0 : index
      %22 = vector.load %arg8[%c0_12, %c0_13] : memref<256x128xf32, #tpu.memory_space<vmem>>, vector<256x128xf32>
      %c0_14 = arith.constant 0 : index
      %c0_15 = arith.constant 0 : index
      %c0_16 = arith.constant 0 : index
      %23 = vector.load %arg6[%c0_14, %c0_15, %c0_16] : memref<1x256x1xf32, #tpu.memory_space<vmem>>, vector<1x256x1xf32>
      %24 = vector.shape_cast %23 : vector<1x256x1xf32> to vector<256x1xf32>
      %25 = vector.broadcast %24 : vector<256x1xf32> to vector<256x128xf32>
      %26 = arith.mulf %22, %25 : vector<256x128xf32>
      %27 = arith.truncf %26 : vector<256x128xf32> to vector<256x128xbf16>
      %c0_17 = arith.constant 0 : index
      %c0_18 = arith.constant 0 : index
      %c0_19 = arith.constant 0 : index
      %28 = vector.load %arg4[%c0_17, %c0_18, %c0_19] : memref<1x128x128xbf16, #tpu.memory_space<vmem>>, vector<1x128x128xbf16>
      %29 = vector.shape_cast %28 : vector<1x128x128xbf16> to vector<128x128xbf16>
      %cst_20 = arith.constant dense<0.000000e+00> : vector<256x128xf32>
      %30 = tpu.matmul %27, %29, %cst_20 {dimension_numbers = #tpu.dot_dimension_numbers<[1], [0], [0], [1], [0, 0, 1, 1], [], []>} : vector<256x128xbf16>, vector<128x128xbf16>, vector<256x128xf32> -> vector<256x128xf32>
      %c0_21 = arith.constant 0 : index
      %c0_22 = arith.constant 0 : index
      %c0_23 = arith.constant 0 : index
      %31 = vector.load %arg5[%c0_21, %c0_22, %c0_23] : memref<1x1x128xf32, #tpu.memory_space<vmem>>, vector<1x1x128xf32>
      %32 = vector.shape_cast %31 : vector<1x1x128xf32> to vector<1x128xf32>
      %33 = vector.broadcast %32 : vector<1x128xf32> to vector<256x128xf32>
      %34 = arith.addf %30, %33 : vector<256x128xf32>
      %c2_i32 = arith.constant 2 : i32
      %35 = arith.cmpi slt, %arg0, %c2_i32 : i32
      %36 = arith.extui %35 : i1 to i32
      %c0_i32_24 = arith.constant 0 : i32
      %37 = arith.cmpi ne, %36, %c0_i32_24 : i32
      scf.if %37 {
        %cst_27 = arith.constant 0.000000e+00 : f32
        %41 = vector.broadcast %cst_27 : f32 to vector<256x128xf32>
        %42 = arith.maximumf %34, %41 : vector<256x128xf32>
        %43 = arith.truncf %42 : vector<256x128xf32> to vector<256x128xbf16>
        %c0_28 = arith.constant 0 : index
        %c0_29 = arith.constant 0 : index
        %44 = vector.load %arg7[%c0_28, %c0_29] : memref<256x128xbf16, #tpu.memory_space<vmem>>, vector<256x128xbf16>
        tpu.vector_store %arg7[%c0_28, %c0_29], %43 {strides = array<i32>} : memref<256x128xbf16, #tpu.memory_space<vmem>>, vector<256x128xbf16>,
      } else {
      }
      %c2_i32_25 = arith.constant 2 : i32
      %38 = arith.cmpi eq, %arg0, %c2_i32_25 : i32
      %39 = arith.extui %38 : i1 to i32
      %c0_i32_26 = arith.constant 0 : i32
      %40 = arith.cmpi ne, %39, %c0_i32_26 : i32
      scf.if %40 {
        %41 = tpu.iota {dimensions = array<i32: 1>} : vector<256x128xi32>
        %c8_i32 = arith.constant 8 : i32
        %42 = vector.broadcast %c8_i32 : i32 to vector<256x128xi32>
        %43 = arith.cmpi slt, %41, %42 : vector<256x128xi32>
        %cst_27 = arith.constant -1.000000e+30 : f32
        %44 = vector.broadcast %cst_27 : f32 to vector<256x128xf32>
        %45 = arith.select %43, %34, %44 : vector<256x128xi1>, vector<256x128xf32>
        %cst_28 = arith.constant dense<0xFF800000> : vector<256xf32>
        %46 = vector.multi_reduction <maximumf>, %45, %cst_28 [1] : vector<256x128xf32> to vector<256xf32>
        %47 = vector.shape_cast %46 : vector<256xf32> to vector<256x1xf32>
        %48 = vector.broadcast %47 : vector<256x1xf32> to vector<256x128xf32>
        %49 = arith.subf %45, %48 : vector<256x128xf32>
        %50 = math.exp %49 : vector<256x128xf32>
        %cst_29 = arith.constant dense<0.000000e+00> : vector<256xf32>
        %51 = vector.multi_reduction <add>, %50, %cst_29 [1] : vector<256x128xf32> to vector<256xf32>
        %52 = vector.shape_cast %51 : vector<256xf32> to vector<256x1xf32>
        %53 = math.log %52 : vector<256x1xf32>
        %54 = vector.broadcast %53 : vector<256x1xf32> to vector<256x128xf32>
        %55 = arith.subf %49, %54 : vector<256x128xf32>
        %56 = arith.truncf %55 : vector<256x128xf32> to vector<256x128xbf16>
        %c0_30 = arith.constant 0 : index
        %c0_31 = arith.constant 0 : index
        %57 = vector.load %arg7[%c0_30, %c0_31] : memref<256x128xbf16, #tpu.memory_space<vmem>>, vector<256x128xbf16>
        tpu.vector_store %arg7[%c0_30, %c0_31], %56 {strides = array<i32>} : memref<256x128xbf16, #tpu.memory_space<vmem>>, vector<256x128xbf16>,
      } else {
      }
    } else {
    }
    return
  }
  func.func @transform_1(%arg0: i32, %arg1: i32) -> (i32, i32, i32) {
    %c0_i32 = arith.constant 0 : i32
    %c0_i32_0 = arith.constant 0 : i32
    return %arg0, %c0_i32, %arg1 : i32, i32, i32
  }
  func.func @transform_2(%arg0: i32, %arg1: i32) -> (i32, i32, i32) {
    %c0_i32 = arith.constant 0 : i32
    %c0_i32_0 = arith.constant 0 : i32
    %c0_i32_1 = arith.constant 0 : i32
    return %arg0, %c0_i32, %c0_i32_0 : i32, i32, i32
  }
  func.func @transform_3(%arg0: i32, %arg1: i32) -> (i32, i32, i32) {
    %c0_i32 = arith.constant 0 : i32
    %c0_i32_0 = arith.constant 0 : i32
    %c0_i32_1 = arith.constant 0 : i32
    return %arg0, %c0_i32, %c0_i32_0 : i32, i32, i32
  }
  func.func @transform_4(%arg0: i32, %arg1: i32) -> (i32, i32, i32) {
    %c0_i32 = arith.constant 0 : i32
    %c0_i32_0 = arith.constant 0 : i32
    %c0_i32_1 = arith.constant 0 : i32
    return %arg0, %c0_i32, %c0_i32_0 : i32, i32, i32
  }
  func.func @transform_5(%arg0: i32, %arg1: i32) -> (i32, i32) {
    %c0_i32 = arith.constant 0 : i32
    %c0_i32_0 = arith.constant 0 : i32
    %c0_i32_1 = arith.constant 0 : i32
    return %c0_i32, %c0_i32_0 : i32, i32
  }
}

</mosaic_0001>

<llo_original>
// kernel: tpu_custom_call.1
$region0: #{tpu_custom_call.1}
  #allocation0 [shape = 'u32[]', space=smem, size = 0x4, offset = 0x4, fixed_abs, tag = 'smem constant byte address 0x4 - core index']
  #allocation1 [shape = 'u32[144,128]{1,0:T(1,128)}', space=vmem, size = 0x12000, scoped, tag = 'internal scratch']
  #allocation2 [shape = 'f32[256,128]{1,0:T(8,128)}', space=vmem, size = 0x20000, scoped, tag = 'scratch operand']
  #allocation3 [shape = 's32[1]{0}', space=sflag, size = 0x4, scoped, tag = 'scratch operand']
  #allocation7 [shape = 's32[]', space=sflag, size = 0x4, offset = 0, fixed_abs, tag = 'sflag constant byte address 0x0 - dummy sync flag']
  %s0 = inlined_call_operand.vmem [shape: bf16[256,128], index: 0, kind: input, shape index: {}]
  %s1 = inlined_call_operand.vmem [shape: s8[3,256,256], index: 1, kind: input, shape index: {}]
  %s2 = inlined_call_operand.vmem [shape: bf16[3,128,128], index: 2, kind: input, shape index: {}]
  %s3 = inlined_call_operand.vmem [shape: f32[3,1,128], index: 3, kind: input, shape index: {}]
  %s4 = inlined_call_operand.vmem [shape: f32[3,256,1], index: 4, kind: input, shape index: {}]
  %s5 = inlined_call_operand.hbm [shape: bf16[256,128], index: 5, kind: output, shape index: {}]
  %s6 = sld [smem:[#allocation0]]
  $region141: #{tpu_custom_call.1} parent=0
    _
  %s8 = ssub.s32 1, %s6
  %s9 = scalar_select 0, %s8, %s6
  $region1: #{tpu_custom_call.1} parent=0
    #allocation4 [shape = 'u8[65536]{0}', space=vmem, size = 0x10000, scoped, tag = 'input window, operand 1']
    #allocation5 [shape = 'u8[65536]{0}', space=vmem, size = 0x10000, scoped, tag = 'output window, operand 0, single buffered']
    #allocation6 [shape = 's32[2]{0}', space=sflag, size = 0x8, scoped, tag = 'scoped memory for tpu_custom_call.1']
    %10 = vsyncpa [#allocation6], 0
    loop: start=0, step=1, limit=8
    $region2: #{tpu_custom_call.1} parent=1 // loop_pre_header
      _
    $region3: #{tpu_custom_call.1} parent=1 // loop_header
      %s12 = sphi 0, %s16
      %p13 = scmp.ge.s32.totalorder %s12, 8
      %s19 = sphi 0, %s31
      %s20 = sphi 0, %s27
      %s21 = sphi 0, %s19
      %s22 = sphi 0, %s20
      %s23 = sphi 0, %s21
      %s24 = sphi 0, %s22
      %s36 = sphi 0, %s38
      %s39 = sphi 0, %s36
      %s40 = sphi 0, %s39
      %s56 = sphi 0, %s40
      %s62 = sphi 0, %s64
      %s65 = sphi 0, %s62
      %s66 = sphi 0, %s65
      %s82 = sphi 0, %s66
      %s88 = sphi 0, %s90
      %s91 = sphi 0, %s88
      %s92 = sphi 0, %s91
      %s108 = sphi 0, %s92
      %s114 = sphi 0, %s116
      %s117 = sphi 0, %s114
      %s118 = sphi 0, %s117
      %s134 = sphi 0, %s118
      %s138 = sphi 0, %s138
      %s140 = sphi 0, %s138
      %s141 = sphi 0, %s140
      %s155 = sphi 0, %s141
    $region4: #{tpu_custom_call.1} parent=1 // loop_header_branch
      %15 = sbr.rel (%p13) target = $region8
    $region5: #{tpu_custom_call.1} parent=1 // loop_body
      %s17 = ssub.s32 %s12, 1
      %s18 = ssub.s32 %s12, 2
      %s25 = sadd.s32 1, %s20
      %p26 = scmp.ge.s32.totalorder %s25, 2
      %s27 = scalar_select %p26, 0, %s25
      %s28 = sadd.s32 1, %s19
      %s29 = scalar_select %p26, %s28, %s19
      %p30 = scmp.ge.s32.totalorder %s29, 3
      %s31 = scalar_select %p30, 0, %s29
      %s32 = ssub.s32 %s19, %s31
      %s33 = ssub.s32 %s20, %s27
      %s34 = sor.u32 %s32, %s33
      %p35 = scmp.eq.s32.totalorder %s34, 0
      %s37 = sadd.s32 %s36, 1
      %s38 = scalar_select %p35, %s36, %s37
      %p41 = pneg %p35
      %p42 = scmp.eq.s32.totalorder %s12, 5
      %p43 = por %p41, %p42
      %p44 = scmp.ne.s32.totalorder %s36, %s39
      %p45 = scmp.eq.s32.totalorder %s12, 0
      %p46 = por %p44, %p45
      %p47 = scmp.ne.s32.totalorder %s36, %s39
      %p48 = scmp.eq.s32.totalorder %s17, 5
      %p49 = por %p47, %p48
      %p50 = scmp.ne.s32.totalorder %s39, %s40
      %p51 = scmp.eq.s32.totalorder %s17, 0
      %p52 = por %p50, %p51
      %p53 = scmp.ne.s32.totalorder %s39, %s40
      %p54 = scmp.eq.s32.totalorder %s18, 5
      %p55 = por %p53, %p54
      %p57 = scmp.ne.s32.totalorder %s40, %s56
      %p58 = scmp.eq.s32.totalorder %s18, 0
      %p59 = por %p57, %p58
      %s60 = ssub.s32 %s19, %s31
      %p61 = scmp.eq.s32.totalorder %s60, 0
      %s63 = sadd.s32 %s62, 1
      %s64 = scalar_select %p61, %s62, %s63
      %p67 = pneg %p61
      %p68 = scmp.eq.s32.totalorder %s12, 5
      %p69 = por %p67, %p68
      %p70 = scmp.ne.s32.totalorder %s62, %s65
      %p71 = scmp.eq.s32.totalorder %s12, 0
      %p72 = por %p70, %p71
      %p73 = scmp.ne.s32.totalorder %s62, %s65
      %p74 = scmp.eq.s32.totalorder %s17, 5
      %p75 = por %p73, %p74
      %p76 = scmp.ne.s32.totalorder %s65, %s66
      %p77 = scmp.eq.s32.totalorder %s17, 0
      %p78 = por %p76, %p77
      %p79 = scmp.ne.s32.totalorder %s65, %s66
      %p80 = scmp.eq.s32.totalorder %s18, 5
      %p81 = por %p79, %p80
      %p83 = scmp.ne.s32.totalorder %s66, %s82
      %p84 = scmp.eq.s32.totalorder %s18, 0
      %p85 = por %p83, %p84
      %s86 = ssub.s32 %s19, %s31
      %p87 = scmp.eq.s32.totalorder %s86, 0
      %s89 = sadd.s32 %s88, 1
      %s90 = scalar_select %p87, %s88, %s89
      %p93 = pneg %p87
      %p94 = scmp.eq.s32.totalorder %s12, 5
      %p95 = por %p93, %p94
      %p96 = scmp.ne.s32.totalorder %s88, %s91
      %p97 = scmp.eq.s32.totalorder %s12, 0
      %p98 = por %p96, %p97
      %p99 = scmp.ne.s32.totalorder %s88, %s91
      %p100 = scmp.eq.s32.totalorder %s17, 5
      %p101 = por %p99, %p100
      %p102 = scmp.ne.s32.totalorder %s91, %s92
      %p103 = scmp.eq.s32.totalorder %s17, 0
      %p104 = por %p102, %p103
      %p105 = scmp.ne.s32.totalorder %s91, %s92
      %p106 = scmp.eq.s32.totalorder %s18, 5
      %p107 = por %p105, %p106
      %p109 = scmp.ne.s32.totalorder %s92, %s108
      %p110 = scmp.eq.s32.totalorder %s18, 0
      %p111 = por %p109, %p110
      %s112 = ssub.s32 %s19, %s31
      %p113 = scmp.eq.s32.totalorder %s112, 0
      %s115 = sadd.s32 %s114, 1
      %s116 = scalar_select %p113, %s114, %s115
      %p119 = pneg %p113
      %p120 = scmp.eq.s32.totalorder %s12, 5
      %p121 = por %p119, %p120
      %p122 = scmp.ne.s32.totalorder %s114, %s117
      %p123 = scmp.eq.s32.totalorder %s12, 0
      %p124 = por %p122, %p123
      %p125 = scmp.ne.s32.totalorder %s114, %s117
      %p126 = scmp.eq.s32.totalorder %s17, 5
      %p127 = por %p125, %p126
      %p128 = scmp.ne.s32.totalorder %s117, %s118
      %p129 = scmp.eq.s32.totalorder %s17, 0
      %p130 = por %p128, %p129
      %p131 = scmp.ne.s32.totalorder %s117, %s118
      %p132 = scmp.eq.s32.totalorder %s18, 5
      %p133 = por %p131, %p132
      %p135 = scmp.ne.s32.totalorder %s118, %s134
      %p136 = scmp.eq.s32.totalorder %s18, 0
      %p137 = por %p135, %p136
      %s139 = sadd.s32 %s138, 1
      %p142 = scmp.eq.s32.totalorder %s12, 5
      %p143 = scmp.ne.s32.totalorder %s138, %s140
      %p144 = scmp.eq.s32.totalorder %s12, 0
      %p145 = por %p143, %p144
      %p146 = scmp.ne.s32.totalorder %s138, %s140
      %p147 = scmp.eq.s32.totalorder %s17, 5
      %p148 = por %p146, %p147
      %p149 = scmp.ne.s32.totalorder %s140, %s141
      %p150 = scmp.eq.s32.totalorder %s17, 0
      %p151 = por %p149, %p150
      %p152 = scmp.ne.s32.totalorder %s140, %s141
      %p153 = scmp.eq.s32.totalorder %s18, 5
      %p154 = por %p152, %p153
      %p156 = scmp.ne.s32.totalorder %s141, %s155
      %p157 = scmp.eq.s32.totalorder %s18, 0
      %p158 = por %p156, %p157
      %p159 = scmp.le.s32.totalorder 1, %s12
      %p160 = scmp.lt.s32.totalorder %s12, 7
      %p161 = pnand %p159, %p160
      %p162 = pneg %p161
      // Predicated region
      $region9: #{tpu_custom_call.1} parent=5 // pred_check
        _
      $region10: #{tpu_custom_call.1} parent=5 // pred_check_branch
        %164 = sbr.rel (%p161) target = $region12
      $region11: #{tpu_custom_call.1} parent=5 // pred_region
        %s165 = ssub.s32 %s12, 1
      $region12: #{tpu_custom_call.1} parent=5 // pred_fallthru
        _
      %p166 = scmp.lt.s32.totalorder %s12, 6
      // Predicated region
      $region13: #{tpu_custom_call.1} parent=5 // pred_check
        %p167 = pneg %p166
      $region14: #{tpu_custom_call.1} parent=5 // pred_check_branch
        %169 = sbr.rel (%p167) target = $region16
      $region15: #{tpu_custom_call.1} parent=5 // pred_region
        // Predicated region
        $region17: #{tpu_custom_call.1} parent=15 // pred_check
          %p170 = pneg %p46
        $region18: #{tpu_custom_call.1} parent=15 // pred_check_branch
          %172 = sbr.rel (%p170) target = $region20
        $region19: #{tpu_custom_call.1} parent=15 // pred_region
          %s173 = sand.u32 %s36, 1
          %s174 = sand.u32 %s36, 1
          %s175 = smul.addr %s174, 64
          %s176 = scalar_lea.vmem [#allocation4], %s175
          %s177 = smul.addr %s19, 16
          %s178 = sadd.s32 %s20, %s177
          %s179 = smul.addr %s178, 8
          %s180 = scalar_lea.vmem %s1, %s179
          // Predicated region
          $region21: #{tpu_custom_call.1} parent=19 // pred_check
            _
          $region22: #{tpu_custom_call.1} parent=19 // pred_check_branch
            %182 = sbr.rel (0) target = $region24
          $region23: #{tpu_custom_call.1} parent=19 // pred_region
            // Predicated region
            $region25: #{tpu_custom_call.1} parent=23 // pred_check
              _
            $region26: #{tpu_custom_call.1} parent=23 // pred_check_branch
              %184 = sbr.rel (0) target = $region28
            $region27: #{tpu_custom_call.1} parent=23 // pred_region
              // Predicated region
              $region40: #{tpu_custom_call.1} parent=27 // pred_check
                _
              $region41: #{tpu_custom_call.1} parent=27 // pred_check_branch
                %213 = sbr.rel (0) target = $region43
              $region42: #{tpu_custom_call.1} parent=27 // pred_region
                loop: start=0, step=1, limit=1
                $region44: #{tpu_custom_call.1} parent=42 // loop_pre_header
                  _
                $region45: #{tpu_custom_call.1} parent=42 // loop_header
                  %s215 = sphi 0, %s219
                  %p216 = scmp.ge.s32.totalorder %s215, 1
                  %s220 = sphi %s180, %s180
                  %s221 = sphi %s176, %s176
                $region46: #{tpu_custom_call.1} parent=42 // loop_header_branch
                  %218 = sbr.rel (%p216) target = $region50
                $region47: #{tpu_custom_call.1} parent=42 // loop_body
                  %v222 = vld [vmem:[%s220] sm:$0xff]
                  %223 = vst [vmem:[%s221] sm:$0xff] %v222
                  %v224 = vld [vmem:[%s220 + $0x10] sm:$0xff]
                  %225 = vst [vmem:[%s221 + $0x8] sm:$0xff] %v224
                  %v226 = vld [vmem:[%s220 + $0x20] sm:$0xff]
                  %227 = vst [vmem:[%s221 + $0x10] sm:$0xff] %v226
                  %v228 = vld [vmem:[%s220 + $0x30] sm:$0xff]
                  %229 = vst [vmem:[%s221 + $0x18] sm:$0xff] %v228
                  %v230 = vld [vmem:[%s220 + $0x40] sm:$0xff]
                  %231 = vst [vmem:[%s221 + $0x20] sm:$0xff] %v230
                  %v232 = vld [vmem:[%s220 + $0x50] sm:$0xff]
                  %233 = vst [vmem:[%s221 + $0x28] sm:$0xff] %v232
                  %v234 = vld [vmem:[%s220 + $0x60] sm:$0xff]
                  %235 = vst [vmem:[%s221 + $0x30] sm:$0xff] %v234
                  %v236 = vld [vmem:[%s220 + $0x70] sm:$0xff]
                  %237 = vst [vmem:[%s221 + $0x38] sm:$0xff] %v236
                $region48: #{tpu_custom_call.1} parent=42 // loop_footer
                  %s219 = sadd.s32 1, %s215
                $region49: #{tpu_custom_call.1} parent=42 // loop_footer_branch
                  %214 = sbr.rel target = $region45
                $region50: #{tpu_custom_call.1} parent=42 // loop_exit
                  _
              $region43: #{tpu_custom_call.1} parent=27 // pred_fallthru
                _
              // Predicated region
              $region51: #{tpu_custom_call.1} parent=27 // pred_check
                _
              $region52: #{tpu_custom_call.1} parent=27 // pred_check_branch
                %239 = sbr.rel target = $region54
              $region53: #{tpu_custom_call.1} parent=27 // pred_region
                _
              $region54: #{tpu_custom_call.1} parent=27 // pred_fallthru
                _
            $region28: #{tpu_custom_call.1} parent=23 // pred_fallthru
              _
            // Predicated region
            $region29: #{tpu_custom_call.1} parent=23 // pred_check
              _
            $region30: #{tpu_custom_call.1} parent=23 // pred_check_branch
              %186 = sbr.rel target = $region32
            $region31: #{tpu_custom_call.1} parent=23 // pred_region
              loop: start=0, step=1, limit=1
              $region33: #{tpu_custom_call.1} parent=31 // loop_pre_header
                _
              $region34: #{tpu_custom_call.1} parent=31 // loop_header
                %s189 = sphi 0, %s193
                %p190 = scmp.ge.s32.totalorder %s189, 1
                %s194 = sphi %s180, %s180
                %s195 = sphi %s176, %s176
              $region35: #{tpu_custom_call.1} parent=31 // loop_header_branch
                %192 = sbr.rel (%p190) target = $region39
              $region36: #{tpu_custom_call.1} parent=31 // loop_body
                %v196 = vld [vmem:[%s194] sm:$0xff]
                %197 = vst [vmem:[%s195] sm:$0xff] %v196
                %v198 = vld [vmem:[%s194 + $0x10] sm:$0xff]
                %199 = vst [vmem:[%s195 + $0x8] sm:$0xff] %v198
                %v200 = vld [vmem:[%s194 + $0x20] sm:$0xff]
                %201 = vst [vmem:[%s195 + $0x10] sm:$0xff] %v200
                %v202 = vld [vmem:[%s194 + $0x30] sm:$0xff]
                %203 = vst [vmem:[%s195 + $0x18] sm:$0xff] %v202
                %v204 = vld [vmem:[%s194 + $0x40] sm:$0xff]
                %205 = vst [vmem:[%s195 + $0x20] sm:$0xff] %v204
                %v206 = vld [vmem:[%s194 + $0x50] sm:$0xff]
                %207 = vst [vmem:[%s195 + $0x28] sm:$0xff] %v206
                %v208 = vld [vmem:[%s194 + $0x60] sm:$0xff]
                %209 = vst [vmem:[%s195 + $0x30] sm:$0xff] %v208
                %v210 = vld [vmem:[%s194 + $0x70] sm:$0xff]
                %211 = vst [vmem:[%s195 + $0x38] sm:$0xff] %v210
              $region37: #{tpu_custom_call.1} parent=31 // loop_footer
                %s193 = sadd.s32 1, %s189
              $region38: #{tpu_custom_call.1} parent=31 // loop_footer_branch
                %188 = sbr.rel target = $region34
              $region39: #{tpu_custom_call.1} parent=31 // loop_exit
                _
            $region32: #{tpu_custom_call.1} parent=23 // pred_fallthru
              _
          $region24: #{tpu_custom_call.1} parent=19 // pred_fallthru
            _
          %240 = vnop
        $region20: #{tpu_custom_call.1} parent=15 // pred_fallthru
          _
        // Predicated region
        $region55: #{tpu_custom_call.1} parent=15 // pred_check
          %p241 = pneg %p72
        $region56: #{tpu_custom_call.1} parent=15 // pred_check_branch
          %243 = sbr.rel (%p241) target = $region58
        $region57: #{tpu_custom_call.1} parent=15 // pred_region
          %p244 = scmp.lt.s32.totalorder %s19, 2
          %s245 = scalar_select %p244, %s19, 2
          %s246 = smul.addr %s245, 16
          %s247 = smul.addr %s246, 4
          %s248 = scalar_lea.vmem %s2, %s247
        $region58: #{tpu_custom_call.1} parent=15 // pred_fallthru
          _
        // Predicated region
        $region59: #{tpu_custom_call.1} parent=15 // pred_check
          %p249 = pneg %p98
        $region60: #{tpu_custom_call.1} parent=15 // pred_check_branch
          %251 = sbr.rel (%p249) target = $region62
        $region61: #{tpu_custom_call.1} parent=15 // pred_region
          %p252 = scmp.lt.s32.totalorder %s19, 2
          %s253 = scalar_select %p252, %s19, 2
          %s254 = scalar_lea.vmem %s3, %s253
        $region62: #{tpu_custom_call.1} parent=15 // pred_fallthru
          _
        // Predicated region
        $region63: #{tpu_custom_call.1} parent=15 // pred_check
          %p255 = pneg %p124
        $region64: #{tpu_custom_call.1} parent=15 // pred_check_branch
          %257 = sbr.rel (%p255) target = $region66
        $region65: #{tpu_custom_call.1} parent=15 // pred_region
          %p258 = scmp.lt.s32.totalorder %s19, 2
          %s259 = scalar_select %p258, %s19, 2
          %s260 = smul.addr %s259, 32
          %s261 = smul.addr %s260, 8
          %s262 = scalar_lea.vmem %s4, %s261
        $region66: #{tpu_custom_call.1} parent=15 // pred_fallthru
          _
      $region16: #{tpu_custom_call.1} parent=5 // pred_fallthru
        _
      %p263 = scmp.le.s32.totalorder 1, %s12
      %p264 = scmp.lt.s32.totalorder %s12, 7
      %p265 = pnand %p263, %p264
      %p266 = pneg %p265
      // Predicated region
      $region67: #{tpu_custom_call.1} parent=5 // pred_check
        _
      $region68: #{tpu_custom_call.1} parent=5 // pred_check_branch
        %268 = sbr.rel (%p265) target = $region70
      $region69: #{tpu_custom_call.1} parent=5 // pred_region
        %s269 = ssub.s32 %s12, 1
        %s270 = sand.u32 %s39, 1
        %s271 = sand.u32 %s39, 1
        %s272 = smul.addr %s271, 64
        %s273 = scalar_lea.vmem [#allocation4], %s272
        // Predicated region
        $region71: #{tpu_custom_call.1} parent=69 // pred_check
          %p274 = pneg %p52
        $region72: #{tpu_custom_call.1} parent=69 // pred_check_branch
          %276 = sbr.rel (%p274) target = $region74
        $region73: #{tpu_custom_call.1} parent=69 // pred_region
          _
        $region74: #{tpu_custom_call.1} parent=69 // pred_fallthru
          _
        %s277 = sand.u32 %s39, 1
        %s278 = sand.u32 %s39, 1
        %s279 = smul.addr %s278, 64
        %s280 = scalar_lea.vmem [#allocation4], %s279
        %p281 = pneg %p52
        %p282 = pneg %p49
        %p283 = scmp.lt.s32.totalorder %s21, 2
        %s284 = scalar_select %p283, %s21, 2
        %s285 = smul.addr %s284, 16
        %s286 = smul.addr %s285, 4
        %s287 = scalar_lea.vmem %s2, %s286
        %p288 = pneg %p78
        %p289 = pneg %p75
        %p290 = scmp.lt.s32.totalorder %s21, 2
        %s291 = scalar_select %p290, %s21, 2
        %s292 = scalar_lea.vmem %s3, %s291
        %p293 = pneg %p104
        %p294 = pneg %p101
        %p295 = scmp.lt.s32.totalorder %s21, 2
        %s296 = scalar_select %p295, %s21, 2
        %s297 = smul.addr %s296, 32
        %s298 = smul.addr %s297, 8
        %s299 = scalar_lea.vmem %s4, %s298
        %p300 = pneg %p130
        %p301 = pneg %p127
        %p302 = pneg %p151
        %p303 = pneg %p148
        %p304 = scmp.lt.s32.totalorder %s21, 2
        %s305 = scalar_select %p304, %s21, 2
        %s306 = smul.addr %s305, 16
        %s307 = smul.addr %s306, 4
        %s308 = scalar_lea.vmem %s2, %s307
        %p309 = scmp.lt.s32.totalorder %s21, 2
        %s310 = scalar_select %p309, %s21, 2
        %s311 = scalar_lea.vmem %s3, %s310
        %p312 = scmp.lt.s32.totalorder %s21, 2
        %s313 = scalar_select %p312, %s21, 2
        %s314 = smul.addr %s313, 32
        %s315 = smul.addr %s314, 8
        %s316 = scalar_lea.vmem %s4, %s315
        %p318 = scmp.eq.s32.totalorder %s21, 0
        %p319 = scmp.eq.s32.totalorder %s22, 0
        %p320 = pnand %p318, %p319
        %p321 = pneg %p320
        // Predicated region
        $region75: #{tpu_custom_call.1} parent=69 // pred_check
          _
        $region76: #{tpu_custom_call.1} parent=69 // pred_check_branch
          %323 = sbr.rel (%p320) target = $region78
        $region77: #{tpu_custom_call.1} parent=69 // pred_region
          %p325 = scmp.lt.u32.totalorder 128, 8
          %p326 = pneg %p325
          // Predicated region
          $region79: #{tpu_custom_call.1} parent=77 // pred_check
            _
          $region80: #{tpu_custom_call.1} parent=77 // pred_check_branch
            %328 = sbr.rel (%p325) target = $region82
          $region81: #{tpu_custom_call.1} parent=77 // pred_region
            %s343 = sand.u32 128, 7
            %p344 = scmp.eq.s32.totalorder %s343, 0
            // Predicated region
            $region94: #{tpu_custom_call.1} parent=81 // pred_check
              %p345 = pneg %p344
            $region95: #{tpu_custom_call.1} parent=81 // pred_check_branch
              %347 = sbr.rel (%p345) target = $region97
            $region96: #{tpu_custom_call.1} parent=81 // pred_region
              loop: start=0, step=1, limit=1
              $region98: #{tpu_custom_call.1} parent=96 // loop_pre_header
                _
              $region99: #{tpu_custom_call.1} parent=96 // loop_header
                %s349 = sphi 0, %s353
                %p350 = scmp.ge.s32.totalorder %s349, 1
                %s354 = sphi %s0, %s0
                %s355 = sphi [#allocation5], [#allocation5]
              $region100: #{tpu_custom_call.1} parent=96 // loop_header_branch
                %352 = sbr.rel (%p350) target = $region104
              $region101: #{tpu_custom_call.1} parent=96 // loop_body
                %v356 = vld [vmem:[%s354] sm:$0xff]
                %357 = vst [vmem:[%s355] sm:$0xff] %v356
                %v358 = vld [vmem:[%s354 + $0x8] sm:$0xff]
                %359 = vst [vmem:[%s355 + $0x8] sm:$0xff] %v358
                %v360 = vld [vmem:[%s354 + $0x10] sm:$0xff]
                %361 = vst [vmem:[%s355 + $0x10] sm:$0xff] %v360
                %v362 = vld [vmem:[%s354 + $0x18] sm:$0xff]
                %363 = vst [vmem:[%s355 + $0x18] sm:$0xff] %v362
                %v364 = vld [vmem:[%s354 + $0x20] sm:$0xff]
                %365 = vst [vmem:[%s355 + $0x20] sm:$0xff] %v364
                %v366 = vld [vmem:[%s354 + $0x28] sm:$0xff]
                %367 = vst [vmem:[%s355 + $0x28] sm:$0xff] %v366
                %v368 = vld [vmem:[%s354 + $0x30] sm:$0xff]
                %369 = vst [vmem:[%s355 + $0x30] sm:$0xff] %v368
                %v370 = vld [vmem:[%s354 + $0x38] sm:$0xff]
                %371 = vst [vmem:[%s355 + $0x38] sm:$0xff] %v370
                %v372 = vld [vmem:[%s354 + $0x40] sm:$0xff]
                %373 = vst [vmem:[%s355 + $0x40] sm:$0xff] %v372
                %v374 = vld [vmem:[%s354 + $0x48] sm:$0xff]
                %375 = vst [vmem:[%s355 + $0x48] sm:$0xff] %v374
                %v376 = vld [vmem:[%s354 + $0x50] sm:$0xff]
                %377 = vst [vmem:[%s355 + $0x50] sm:$0xff] %v376
                %v378 = vld [vmem:[%s354 + $0x58] sm:$0xff]
                %379 = vst [vmem:[%s355 + $0x58] sm:$0xff] %v378
                %v380 = vld [vmem:[%s354 + $0x60] sm:$0xff]
                %381 = vst [vmem:[%s355 + $0x60] sm:$0xff] %v380
                %v382 = vld [vmem:[%s354 + $0x68] sm:$0xff]
                %383 = vst [vmem:[%s355 + $0x68] sm:$0xff] %v382
                %v384 = vld [vmem:[%s354 + $0x70] sm:$0xff]
                %385 = vst [vmem:[%s355 + $0x70] sm:$0xff] %v384
                %v386 = vld [vmem:[%s354 + $0x78] sm:$0xff]
                %387 = vst [vmem:[%s355 + $0x78] sm:$0xff] %v386
              $region102: #{tpu_custom_call.1} parent=96 // loop_footer
                %s353 = sadd.s32 1, %s349
              $region103: #{tpu_custom_call.1} parent=96 // loop_footer_branch
                %348 = sbr.rel target = $region99
              $region104: #{tpu_custom_call.1} parent=96 // loop_exit
                _
            $region97: #{tpu_custom_call.1} parent=81 // pred_fallthru
              _
            %p388 = pneg %p344
            // Predicated region
            $region105: #{tpu_custom_call.1} parent=81 // pred_check
              _
            $region106: #{tpu_custom_call.1} parent=81 // pred_check_branch
              %390 = sbr.rel (%p344) target = $region108
            $region107: #{tpu_custom_call.1} parent=81 // pred_region
              %s391 = sand.u32 128, 7
            $region108: #{tpu_custom_call.1} parent=81 // pred_fallthru
              _
          $region82: #{tpu_custom_call.1} parent=77 // pred_fallthru
            _
          // Predicated region
          $region83: #{tpu_custom_call.1} parent=77 // pred_check
            %p329 = pneg %p325
          $region84: #{tpu_custom_call.1} parent=77 // pred_check_branch
            %331 = sbr.rel (%p329) target = $region86
          $region85: #{tpu_custom_call.1} parent=77 // pred_region
            %s332 = sshllo.u32 0, 128
            loop: start=0, step=1, limit=1
            $region87: #{tpu_custom_call.1} parent=85 // loop_pre_header
              _
            $region88: #{tpu_custom_call.1} parent=85 // loop_header
              %s334 = sphi 0, %s338
              %p335 = scmp.ge.s32.totalorder %s334, 1
              %s339 = sphi %s0, %s0
              %s340 = sphi [#allocation5], [#allocation5]
            $region89: #{tpu_custom_call.1} parent=85 // loop_header_branch
              %337 = sbr.rel (%p335) target = $region93
            $region90: #{tpu_custom_call.1} parent=85 // loop_body
              %v341 = vld [vmem:[%s339] sm:%s332]
              %342 = vst [vmem:[%s340] sm:%s332] %v341
            $region91: #{tpu_custom_call.1} parent=85 // loop_footer
              %s338 = sadd.s32 1, %s334
            $region92: #{tpu_custom_call.1} parent=85 // loop_footer_branch
              %333 = sbr.rel target = $region88
            $region93: #{tpu_custom_call.1} parent=85 // loop_exit
              _
          $region86: #{tpu_custom_call.1} parent=77 // pred_fallthru
            _
          // Predicated region
          $region109: #{tpu_custom_call.1} parent=77 // pred_check
            _
          $region110: #{tpu_custom_call.1} parent=77 // pred_check_branch
            %394 = sbr.rel (0) target = $region112
          $region111: #{tpu_custom_call.1} parent=77 // pred_region
            %395 = vsyncadd [#allocation3], 2048
          $region112: #{tpu_custom_call.1} parent=77 // pred_fallthru
            _
          %s396 = smul.u32 4, 32
          %s397 = smul.u32 %s396, 1
          %s398 = sshll.u32 %s397, 4
          %399 = dma.done [#allocation3], %s398
        $region78: #{tpu_custom_call.1} parent=69 // pred_fallthru
          _
        // Predicated region
        $region113: #{tpu_custom_call.1} parent=69 // pred_check
          %p400 = pneg %p319
        $region114: #{tpu_custom_call.1} parent=69 // pred_check_branch
          %402 = sbr.rel (%p400) target = $region116
        $region115: #{tpu_custom_call.1} parent=69 // pred_region
          %403 = vst [vmem:[#allocation2] sm:$0xff] 0.0
          %404 = vst [vmem:[#allocation2 + $0x8] sm:$0xff] 0.0
          %405 = vst [vmem:[#allocation2 + $0x10] sm:$0xff] 0.0
          %406 = vst [vmem:[#allocation2 + $0x18] sm:$0xff] 0.0
          %407 = vst [vmem:[#allocation2 + $0x20] sm:$0xff] 0.0
          %408 = vst [vmem:[#allocation2 + $0x28] sm:$0xff] 0.0
          %409 = vst [vmem:[#allocation2 + $0x30] sm:$0xff] 0.0
          %410 = vst [vmem:[#allocation2 + $0x38] sm:$0xff] 0.0
          %411 = vst [vmem:[#allocation2 + $0x40] sm:$0xff] 0.0
          %412 = vst [vmem:[#allocation2 + $0x48] sm:$0xff] 0.0
          %413 = vst [vmem:[#allocation2 + $0x50] sm:$0xff] 0.0
          %414 = vst [vmem:[#allocation2 + $0x58] sm:$0xff] 0.0
          %415 = vst [vmem:[#allocation2 + $0x60] sm:$0xff] 0.0
          %416 = vst [vmem:[#allocation2 + $0x68] sm:$0xff] 0.0
          %417 = vst [vmem:[#allocation2 + $0x70] sm:$0xff] 0.0
          %418 = vst [vmem:[#allocation2 + $0x78] sm:$0xff] 0.0
          %419 = vst [vmem:[#allocation2 + $0x80] sm:$0xff] 0.0
          %420 = vst [vmem:[#allocation2 + $0x88] sm:$0xff] 0.0
          %421 = vst [vmem:[#allocation2 + $0x90] sm:$0xff] 0.0
          %422 = vst [vmem:[#allocation2 + $0x98] sm:$0xff] 0.0
          %423 = vst [vmem:[#allocation2 + $0xa0] sm:$0xff] 0.0
          %424 = vst [vmem:[#allocation2 + $0xa8] sm:$0xff] 0.0
          %425 = vst [vmem:[#allocation2 + $0xb0] sm:$0xff] 0.0
          %426 = vst [vmem:[#allocation2 + $0xb8] sm:$0xff] 0.0
          %427 = vst [vmem:[#allocation2 + $0xc0] sm:$0xff] 0.0
          %428 = vst [vmem:[#allocation2 + $0xc8] sm:$0xff] 0.0
          %429 = vst [vmem:[#allocation2 + $0xd0] sm:$0xff] 0.0
          %430 = vst [vmem:[#allocation2 + $0xd8] sm:$0xff] 0.0
          %431 = vst [vmem:[#allocation2 + $0xe0] sm:$0xff] 0.0
          %432 = vst [vmem:[#allocation2 + $0xe8] sm:$0xff] 0.0
          %433 = vst [vmem:[#allocation2 + $0xf0] sm:$0xff] 0.0
          %434 = vst [vmem:[#allocation2 + $0xf8] sm:$0xff] 0.0
        $region116: #{tpu_custom_call.1} parent=69 // pred_fallthru
          _
        %v435 = vld [vmem:[%s273] sm:$0xff]
        %v436 = vld [vmem:[%s273 + $0x8] sm:$0xff]
        %v437 = vld [vmem:[%s273 + $0x10] sm:$0xff]
        %v438 = vld [vmem:[%s273 + $0x18] sm:$0xff]
        %v439 = vld [vmem:[%s273 + $0x20] sm:$0xff]
        %v440 = vld [vmem:[%s273 + $0x28] sm:$0xff]
        %v441 = vld [vmem:[%s273 + $0x30] sm:$0xff]
        %v442 = vld [vmem:[%s273 + $0x38] sm:$0xff]
        %v443 = vunpack.c.l.s8.bf16 %v435
        %v444 = vunpack.c.h.s8.bf16 %v435
        %v445 = vunpack.c.l.s8.bf16 %v436
        %v446 = vunpack.c.h.s8.bf16 %v436
        %v447 = vunpack.c.l.s8.bf16 %v437
        %v448 = vunpack.c.h.s8.bf16 %v437
        %v449 = vunpack.c.l.s8.bf16 %v438
        %v450 = vunpack.c.h.s8.bf16 %v438
        %v451 = vunpack.c.l.s8.bf16 %v439
        %v452 = vunpack.c.h.s8.bf16 %v439
        %v453 = vunpack.c.l.s8.bf16 %v440
        %v454 = vunpack.c.h.s8.bf16 %v440
        %v455 = vunpack.c.l.s8.bf16 %v441
        %v456 = vunpack.c.h.s8.bf16 %v441
        %v457 = vunpack.c.l.s8.bf16 %v442
        %v458 = vunpack.c.h.s8.bf16 %v442
        %s459 = smul.u32 %s22, 128
        %s460 = sshra.s32 %s459, 3
        %s461 = sand.u32 %s459, 7
        %s462 = smul.addr %s460, 4
        %s463 = scalar_lea.vmem [#allocation5], %s462
        %v464 = vld [vmem:[%s463] sm:$0xf]
        %v465 = vld [vmem:[%s463 + $0x4] sm:$0xf]
        %v466 = vld [vmem:[%s463 + $0x8] sm:$0xf]
        %v467 = vld [vmem:[%s463 + $0xc] sm:$0xf]
        %v468 = vld [vmem:[%s463 + $0x10] sm:$0xf]
        %v469 = vld [vmem:[%s463 + $0x14] sm:$0xf]
        %v470 = vld [vmem:[%s463 + $0x18] sm:$0xf]
        %v471 = vld [vmem:[%s463 + $0x1c] sm:$0xf]
        %v472 = vld [vmem:[%s463 + $0x20] sm:$0xf]
        %v473 = vld [vmem:[%s463 + $0x24] sm:$0xf]
        %v474 = vld [vmem:[%s463 + $0x28] sm:$0xf]
        %v475 = vld [vmem:[%s463 + $0x2c] sm:$0xf]
        %v476 = vld [vmem:[%s463 + $0x30] sm:$0xf]
        %v477 = vld [vmem:[%s463 + $0x34] sm:$0xf]
        %v478 = vld [vmem:[%s463 + $0x38] sm:$0xf]
        %v479 = vld [vmem:[%s463 + $0x3c] sm:$0xf]
        %v480 = vld [vmem:[#allocation2] sm:$0xff]
        %v481 = vld [vmem:[#allocation2 + $0x8] sm:$0xff]
        %v482 = vld [vmem:[#allocation2 + $0x10] sm:$0xff]
        %v483 = vld [vmem:[#allocation2 + $0x18] sm:$0xff]
        %v484 = vld [vmem:[#allocation2 + $0x20] sm:$0xff]
        %v485 = vld [vmem:[#allocation2 + $0x28] sm:$0xff]
        %v486 = vld [vmem:[#allocation2 + $0x30] sm:$0xff]
        %v487 = vld [vmem:[#allocation2 + $0x38] sm:$0xff]
        %v488 = vld [vmem:[#allocation2 + $0x40] sm:$0xff]
        %v489 = vld [vmem:[#allocation2 + $0x48] sm:$0xff]
        %v490 = vld [vmem:[#allocation2 + $0x50] sm:$0xff]
        %v491 = vld [vmem:[#allocation2 + $0x58] sm:$0xff]
        %v492 = vld [vmem:[#allocation2 + $0x60] sm:$0xff]
        %v493 = vld [vmem:[#allocation2 + $0x68] sm:$0xff]
        %v494 = vld [vmem:[#allocation2 + $0x70] sm:$0xff]
        %v495 = vld [vmem:[#allocation2 + $0x78] sm:$0xff]
        %v496 = vld [vmem:[#allocation2 + $0x80] sm:$0xff]
        %v497 = vld [vmem:[#allocation2 + $0x88] sm:$0xff]
        %v498 = vld [vmem:[#allocation2 + $0x90] sm:$0xff]
        %v499 = vld [vmem:[#allocation2 + $0x98] sm:$0xff]
        %v500 = vld [vmem:[#allocation2 + $0xa0] sm:$0xff]
        %v501 = vld [vmem:[#allocation2 + $0xa8] sm:$0xff]
        %v502 = vld [vmem:[#allocation2 + $0xb0] sm:$0xff]
        %v503 = vld [vmem:[#allocation2 + $0xb8] sm:$0xff]
        %v504 = vld [vmem:[#allocation2 + $0xc0] sm:$0xff]
        %v505 = vld [vmem:[#allocation2 + $0xc8] sm:$0xff]
        %v506 = vld [vmem:[#allocation2 + $0xd0] sm:$0xff]
        %v507 = vld [vmem:[#allocation2 + $0xd8] sm:$0xff]
        %v508 = vld [vmem:[#allocation2 + $0xe0] sm:$0xff]
        %v509 = vld [vmem:[#allocation2 + $0xe8] sm:$0xff]
        %v510 = vld [vmem:[#allocation2 + $0xf0] sm:$0xff]
        %v511 = vld [vmem:[#allocation2 + $0xf8] sm:$0xff]
        %v528 = vunpack.c.l.b16 %v464
        %v529 = vunpack.c.l.b16 %v465
        %v530 = vunpack.c.l.b16 %v466
        %v531 = vunpack.c.l.b16 %v467
        %v532 = vunpack.c.l.b16 %v468
        %v533 = vunpack.c.l.b16 %v469
        %v534 = vunpack.c.l.b16 %v470
        %v535 = vunpack.c.l.b16 %v471
        %v536 = vunpack.c.l.b16 %v472
        %v537 = vunpack.c.l.b16 %v473
        %v538 = vunpack.c.l.b16 %v474
        %v539 = vunpack.c.l.b16 %v475
        %v540 = vunpack.c.l.b16 %v476
        %v541 = vunpack.c.l.b16 %v477
        %v542 = vunpack.c.l.b16 %v478
        %v543 = vunpack.c.l.b16 %v479
        %v544 = vpack.c.b16 %v529, %v528
        %v545 = vpack.c.b16 %v531, %v530
        %v546 = vpack.c.b16 %v533, %v532
        %v547 = vpack.c.b16 %v535, %v534
        %v548 = vpack.c.b16 %v537, %v536
        %v549 = vpack.c.b16 %v539, %v538
        %v550 = vpack.c.b16 %v541, %v540
        %v551 = vpack.c.b16 %v543, %v542
        %560 = vmatprep.subr.bf16.mxu0 0
        %561 = vmatpush1.bf16.msra.mxu0 %v544
        %562 = vmatprep.subr.bf16.mxu0 0
        %563 = vmatpush1.bf16.msra.mxu0 %v545
        %564 = vmatprep.subr.bf16.mxu0 0
        %565 = vmatpush1.bf16.msra.mxu0 %v546
        %566 = vmatprep.subr.bf16.mxu0 0
        %567 = vmatpush1.bf16.msra.mxu0 %v547
        %568 = vmatprep.subr.bf16.mxu0 0
        %569 = vmatpush1.bf16.msra.mxu0 %v548
        %570 = vmatprep.subr.bf16.mxu0 0
        %571 = vmatpush1.bf16.msra.mxu0 %v549
        %572 = vmatprep.subr.bf16.mxu0 0
        %573 = vmatpush1.bf16.msra.mxu0 %v550
        %574 = vmatprep.subr.bf16.mxu0 0
        %575 = vmatpush1.bf16.msra.mxu0 %v551
        %576 = vmatprep.subr.bf16.mxu0 0
        %577 = vmatpush1.bf16.msra.mxu0 0
        %578 = vmatprep.subr.bf16.mxu0 0
        %579 = vmatpush1.bf16.msra.mxu0 0
        %580 = vmatprep.subr.bf16.mxu0 0
        %581 = vmatpush1.bf16.msra.mxu0 0
        %582 = vmatprep.subr.bf16.mxu0 0
        %583 = vmatpush1.bf16.msra.mxu0 0
        %584 = vmatprep.subr.bf16.mxu0 0
        %585 = vmatpush1.bf16.msra.mxu0 0
        %586 = vmatprep.subr.bf16.mxu0 0
        %587 = vmatpush1.bf16.msra.mxu0 0
        %588 = vmatprep.subr.bf16.mxu0 0
        %589 = vmatpush1.bf16.msra.mxu0 0
        %590 = vmatprep.subr.bf16.mxu0 0
        %591 = vmatpush1.bf16.msra.mxu0 0
        %592 = vmatprep.mubr.bf16.mxu0 0
        %593 = vmatmul.mubr.bf16.gmra.mrb[0].mxu0 %v443
        %v594 = vpop.f32.mrb[0].mxu0
        %v595 = vadd.f32 0.0, %v594
        %v596 = vpop.f32.mrb[0].mxu0
        %v597 = vpop.f32.mrb[0].mxu0
        %v598 = vadd.f32 0.0, %v597
        %v599 = vpop.f32.mrb[0].mxu0
        %600 = vmatprep.mubr.bf16.mxu0 0
        %601 = vmatmul.mubr.bf16.gmra.mrb[0].mxu0 %v444
        %v602 = vpop.f32.mrb[0].mxu0
        %v603 = vadd.f32 0.0, %v602
        %v604 = vpop.f32.mrb[0].mxu0
        %v605 = vpop.f32.mrb[0].mxu0
        %v606 = vadd.f32 0.0, %v605
        %v607 = vpop.f32.mrb[0].mxu0
        %608 = vmatprep.mubr.bf16.mxu0 0
        %609 = vmatmul.mubr.bf16.gmra.mrb[0].mxu0 %v445
        %v610 = vpop.f32.mrb[0].mxu0
        %v611 = vadd.f32 0.0, %v610
        %v612 = vpop.f32.mrb[0].mxu0
        %v613 = vpop.f32.mrb[0].mxu0
        %v614 = vadd.f32 0.0, %v613
        %v615 = vpop.f32.mrb[0].mxu0
        %616 = vmatprep.mubr.bf16.mxu0 0
        %617 = vmatmul.mubr.bf16.gmra.mrb[0].mxu0 %v446
        %v618 = vpop.f32.mrb[0].mxu0
        %v619 = vadd.f32 0.0, %v618
        %v620 = vpop.f32.mrb[0].mxu0
        %v621 = vpop.f32.mrb[0].mxu0
        %v622 = vadd.f32 0.0, %v621
        %v623 = vpop.f32.mrb[0].mxu0
        %624 = vmatprep.mubr.bf16.mxu0 0
        %625 = vmatmul.mubr.bf16.gmra.mrb[0].mxu0 %v447
        %v626 = vpop.f32.mrb[0].mxu0
        %v627 = vadd.f32 0.0, %v626
        %v628 = vpop.f32.mrb[0].mxu0
        %v629 = vpop.f32.mrb[0].mxu0
        %v630 = vadd.f32 0.0, %v629
        %v631 = vpop.f32.mrb[0].mxu0
        %632 = vmatprep.mubr.bf16.mxu0 0
        %633 = vmatmul.mubr.bf16.gmra.mrb[0].mxu0 %v448
        %v634 = vpop.f32.mrb[0].mxu0
        %v635 = vadd.f32 0.0, %v634
        %v636 = vpop.f32.mrb[0].mxu0
        %v637 = vpop.f32.mrb[0].mxu0
        %v638 = vadd.f32 0.0, %v637
        %v639 = vpop.f32.mrb[0].mxu0
        %640 = vmatprep.mubr.bf16.mxu0 0
        %641 = vmatmul.mubr.bf16.gmra.mrb[0].mxu0 %v449
        %v642 = vpop.f32.mrb[0].mxu0
        %v643 = vadd.f32 0.0, %v642
        %v644 = vpop.f32.mrb[0].mxu0
        %v645 = vpop.f32.mrb[0].mxu0
        %v646 = vadd.f32 0.0, %v645
        %v647 = vpop.f32.mrb[0].mxu0
        %648 = vmatprep.mubr.bf16.mxu0 0
        %649 = vmatmul.mubr.bf16.gmra.mrb[0].mxu0 %v450
        %v650 = vpop.f32.mrb[0].mxu0
        %v651 = vadd.f32 0.0, %v650
        %v652 = vpop.f32.mrb[0].mxu0
        %v653 = vpop.f32.mrb[0].mxu0
        %v654 = vadd.f32 0.0, %v653
        %v655 = vpop.f32.mrb[0].mxu0
        %656 = vmatprep.mubr.bf16.mxu0 0
        %657 = vmatmul.mubr.bf16.gmra.mrb[0].mxu0 %v451
        %v658 = vpop.f32.mrb[0].mxu0
        %v659 = vadd.f32 0.0, %v658
        %v660 = vpop.f32.mrb[0].mxu0
        %v661 = vpop.f32.mrb[0].mxu0
        %v662 = vadd.f32 0.0, %v661
        %v663 = vpop.f32.mrb[0].mxu0
        %664 = vmatprep.mubr.bf16.mxu0 0
        %665 = vmatmul.mubr.bf16.gmra.mrb[0].mxu0 %v452
        %v666 = vpop.f32.mrb[0].mxu0
        %v667 = vadd.f32 0.0, %v666
        %v668 = vpop.f32.mrb[0].mxu0
        %v669 = vpop.f32.mrb[0].mxu0
        %v670 = vadd.f32 0.0, %v669
        %v671 = vpop.f32.mrb[0].mxu0
        %672 = vmatprep.mubr.bf16.mxu0 0
        %673 = vmatmul.mubr.bf16.gmra.mrb[0].mxu0 %v453
        %v674 = vpop.f32.mrb[0].mxu0
        %v675 = vadd.f32 0.0, %v674
        %v676 = vpop.f32.mrb[0].mxu0
        %v677 = vpop.f32.mrb[0].mxu0
        %v678 = vadd.f32 0.0, %v677
        %v679 = vpop.f32.mrb[0].mxu0
        %680 = vmatprep.mubr.bf16.mxu0 0
        %681 = vmatmul.mubr.bf16.gmra.mrb[0].mxu0 %v454
        %v682 = vpop.f32.mrb[0].mxu0
        %v683 = vadd.f32 0.0, %v682
        %v684 = vpop.f32.mrb[0].mxu0
        %v685 = vpop.f32.mrb[0].mxu0
        %v686 = vadd.f32 0.0, %v685
        %v687 = vpop.f32.mrb[0].mxu0
        %688 = vmatprep.mubr.bf16.mxu0 0
        %689 = vmatmul.mubr.bf16.gmra.mrb[0].mxu0 %v455
        %v690 = vpop.f32.mrb[0].mxu0
        %v691 = vadd.f32 0.0, %v690
        %v692 = vpop.f32.mrb[0].mxu0
        %v693 = vpop.f32.mrb[0].mxu0
        %v694 = vadd.f32 0.0, %v693
        %v695 = vpop.f32.mrb[0].mxu0
        %696 = vmatprep.mubr.bf16.mxu0 0
        %697 = vmatmul.mubr.bf16.gmra.mrb[0].mxu0 %v456
        %v698 = vpop.f32.mrb[0].mxu0
        %v699 = vadd.f32 0.0, %v698
        %v700 = vpop.f32.mrb[0].mxu0
        %v701 = vpop.f32.mrb[0].mxu0
        %v702 = vadd.f32 0.0, %v701
        %v703 = vpop.f32.mrb[0].mxu0
        %704 = vmatprep.mubr.bf16.mxu0 0
        %705 = vmatmul.mubr.bf16.gmra.mrb[0].mxu0 %v457
        %v706 = vpop.f32.mrb[0].mxu0
        %v707 = vadd.f32 0.0, %v706
        %v708 = vpop.f32.mrb[0].mxu0
        %v709 = vpop.f32.mrb[0].mxu0
        %v710 = vadd.f32 0.0, %v709
        %v711 = vpop.f32.mrb[0].mxu0
        %712 = vmatprep.mubr.bf16.mxu0 0
        %713 = vmatmul.mubr.bf16.gmra.mrb[0].mxu0 %v458
        %v714 = vpop.f32.mrb[0].mxu0
        %v715 = vadd.f32 0.0, %v714
        %v716 = vpop.f32.mrb[0].mxu0
        %v717 = vpop.f32.mrb[0].mxu0
        %v718 = vadd.f32 0.0, %v717
        %v719 = vpop.f32.mrb[0].mxu0
        %720 = vdwg.mxu0
        %v721 = vadd.f32 %v480, %v595
        %v722 = vadd.f32 %v481, %v598
        %v723 = vadd.f32 %v482, %v603
        %v724 = vadd.f32 %v483, %v606
        %v725 = vadd.f32 %v484, %v611
        %v726 = vadd.f32 %v485, %v614
        %v727 = vadd.f32 %v486, %v619
        %v728 = vadd.f32 %v487, %v622
        %v729 = vadd.f32 %v488, %v627
        %v730 = vadd.f32 %v489, %v630
        %v731 = vadd.f32 %v490, %v635
        %v732 = vadd.f32 %v491, %v638
        %v733 = vadd.f32 %v492, %v643
        %v734 = vadd.f32 %v493, %v646
        %v735 = vadd.f32 %v494, %v651
        %v736 = vadd.f32 %v495, %v654
        %v737 = vadd.f32 %v496, %v659
        %v738 = vadd.f32 %v497, %v662
        %v739 = vadd.f32 %v498, %v667
        %v740 = vadd.f32 %v499, %v670
        %v741 = vadd.f32 %v500, %v675
        %v742 = vadd.f32 %v501, %v678
        %v743 = vadd.f32 %v502, %v683
        %v744 = vadd.f32 %v503, %v686
        %v745 = vadd.f32 %v504, %v691
        %v746 = vadd.f32 %v505, %v694
        %v747 = vadd.f32 %v506, %v699
        %v748 = vadd.f32 %v507, %v702
        %v749 = vadd.f32 %v508, %v707
        %v750 = vadd.f32 %v509, %v710
        %v751 = vadd.f32 %v510, %v715
        %v752 = vadd.f32 %v511, %v718
        %753 = vst [vmem:[#allocation2] sm:$0xff] %v721
        %754 = vst [vmem:[#allocation2 + $0x8] sm:$0xff] %v722
        %755 = vst [vmem:[#allocation2 + $0x10] sm:$0xff] %v723
        %756 = vst [vmem:[#allocation2 + $0x18] sm:$0xff] %v724
        %757 = vst [vmem:[#allocation2 + $0x20] sm:$0xff] %v725
        %758 = vst [vmem:[#allocation2 + $0x28] sm:$0xff] %v726
        %759 = vst [vmem:[#allocation2 + $0x30] sm:$0xff] %v727
        %760 = vst [vmem:[#allocation2 + $0x38] sm:$0xff] %v728
        %761 = vst [vmem:[#allocation2 + $0x40] sm:$0xff] %v729
        %762 = vst [vmem:[#allocation2 + $0x48] sm:$0xff] %v730
        %763 = vst [vmem:[#allocation2 + $0x50] sm:$0xff] %v731
        %764 = vst [vmem:[#allocation2 + $0x58] sm:$0xff] %v732
        %765 = vst [vmem:[#allocation2 + $0x60] sm:$0xff] %v733
        %766 = vst [vmem:[#allocation2 + $0x68] sm:$0xff] %v734
        %767 = vst [vmem:[#allocation2 + $0x70] sm:$0xff] %v735
        %768 = vst [vmem:[#allocation2 + $0x78] sm:$0xff] %v736
        %769 = vst [vmem:[#allocation2 + $0x80] sm:$0xff] %v737
        %770 = vst [vmem:[#allocation2 + $0x88] sm:$0xff] %v738
        %771 = vst [vmem:[#allocation2 + $0x90] sm:$0xff] %v739
        %772 = vst [vmem:[#allocation2 + $0x98] sm:$0xff] %v740
        %773 = vst [vmem:[#allocation2 + $0xa0] sm:$0xff] %v741
        %774 = vst [vmem:[#allocation2 + $0xa8] sm:$0xff] %v742
        %775 = vst [vmem:[#allocation2 + $0xb0] sm:$0xff] %v743
        %776 = vst [vmem:[#allocation2 + $0xb8] sm:$0xff] %v744
        %777 = vst [vmem:[#allocation2 + $0xc0] sm:$0xff] %v745
        %778 = vst [vmem:[#allocation2 + $0xc8] sm:$0xff] %v746
        %779 = vst [vmem:[#allocation2 + $0xd0] sm:$0xff] %v747
        %780 = vst [vmem:[#allocation2 + $0xd8] sm:$0xff] %v748
        %781 = vst [vmem:[#allocation2 + $0xe0] sm:$0xff] %v749
        %782 = vst [vmem:[#allocation2 + $0xe8] sm:$0xff] %v750
        %783 = vst [vmem:[#allocation2 + $0xf0] sm:$0xff] %v751
        %784 = vst [vmem:[#allocation2 + $0xf8] sm:$0xff] %v752
        %p785 = scmp.eq.s32.totalorder %s22, 1
        // Predicated region
        $region117: #{tpu_custom_call.1} parent=69 // pred_check
          %p786 = pneg %p785
        $region118: #{tpu_custom_call.1} parent=69 // pred_check_branch
          %788 = sbr.rel (%p786) target = $region120
        $region119: #{tpu_custom_call.1} parent=69 // pred_region
          %v789 = vld [vmem:[#allocation2] sm:$0xff]
          %v790 = vld [vmem:[#allocation2 + $0x8] sm:$0xff]
          %v791 = vld [vmem:[#allocation2 + $0x10] sm:$0xff]
          %v792 = vld [vmem:[#allocation2 + $0x18] sm:$0xff]
          %v793 = vld [vmem:[#allocation2 + $0x20] sm:$0xff]
          %v794 = vld [vmem:[#allocation2 + $0x28] sm:$0xff]
          %v795 = vld [vmem:[#allocation2 + $0x30] sm:$0xff]
          %v796 = vld [vmem:[#allocation2 + $0x38] sm:$0xff]
          %v797 = vld [vmem:[#allocation2 + $0x40] sm:$0xff]
          %v798 = vld [vmem:[#allocation2 + $0x48] sm:$0xff]
          %v799 = vld [vmem:[#allocation2 + $0x50] sm:$0xff]
          %v800 = vld [vmem:[#allocation2 + $0x58] sm:$0xff]
          %v801 = vld [vmem:[#allocation2 + $0x60] sm:$0xff]
          %v802 = vld [vmem:[#allocation2 + $0x68] sm:$0xff]
          %v803 = vld [vmem:[#allocation2 + $0x70] sm:$0xff]
          %v804 = vld [vmem:[#allocation2 + $0x78] sm:$0xff]
          %v805 = vld [vmem:[#allocation2 + $0x80] sm:$0xff]
          %v806 = vld [vmem:[#allocation2 + $0x88] sm:$0xff]
          %v807 = vld [vmem:[#allocation2 + $0x90] sm:$0xff]
          %v808 = vld [vmem:[#allocation2 + $0x98] sm:$0xff]
          %v809 = vld [vmem:[#allocation2 + $0xa0] sm:$0xff]
          %v810 = vld [vmem:[#allocation2 + $0xa8] sm:$0xff]
          %v811 = vld [vmem:[#allocation2 + $0xb0] sm:$0xff]
          %v812 = vld [vmem:[#allocation2 + $0xb8] sm:$0xff]
          %v813 = vld [vmem:[#allocation2 + $0xc0] sm:$0xff]
          %v814 = vld [vmem:[#allocation2 + $0xc8] sm:$0xff]
          %v815 = vld [vmem:[#allocation2 + $0xd0] sm:$0xff]
          %v816 = vld [vmem:[#allocation2 + $0xd8] sm:$0xff]
          %v817 = vld [vmem:[#allocation2 + $0xe0] sm:$0xff]
          %v818 = vld [vmem:[#allocation2 + $0xe8] sm:$0xff]
          %v819 = vld [vmem:[#allocation2 + $0xf0] sm:$0xff]
          %v820 = vld [vmem:[#allocation2 + $0xf8] sm:$0xff]
          %v821 = vld [vmem:[%s316] sm:$0xff]
          %v822 = vld [vmem:[%s316 + $0x8] sm:$0xff]
          %v823 = vld [vmem:[%s316 + $0x10] sm:$0xff]
          %v824 = vld [vmem:[%s316 + $0x18] sm:$0xff]
          %v825 = vld [vmem:[%s316 + $0x20] sm:$0xff]
          %v826 = vld [vmem:[%s316 + $0x28] sm:$0xff]
          %v827 = vld [vmem:[%s316 + $0x30] sm:$0xff]
          %v828 = vld [vmem:[%s316 + $0x38] sm:$0xff]
          %v829 = vld [vmem:[%s316 + $0x40] sm:$0xff]
          %v830 = vld [vmem:[%s316 + $0x48] sm:$0xff]
          %v831 = vld [vmem:[%s316 + $0x50] sm:$0xff]
          %v832 = vld [vmem:[%s316 + $0x58] sm:$0xff]
          %v833 = vld [vmem:[%s316 + $0x60] sm:$0xff]
          %v834 = vld [vmem:[%s316 + $0x68] sm:$0xff]
          %v835 = vld [vmem:[%s316 + $0x70] sm:$0xff]
          %v836 = vld [vmem:[%s316 + $0x78] sm:$0xff]
          %v837 = vld [vmem:[%s316 + $0x80] sm:$0xff]
          %v838 = vld [vmem:[%s316 + $0x88] sm:$0xff]
          %v839 = vld [vmem:[%s316 + $0x90] sm:$0xff]
          %v840 = vld [vmem:[%s316 + $0x98] sm:$0xff]
          %v841 = vld [vmem:[%s316 + $0xa0] sm:$0xff]
          %v842 = vld [vmem:[%s316 + $0xa8] sm:$0xff]
          %v843 = vld [vmem:[%s316 + $0xb0] sm:$0xff]
          %v844 = vld [vmem:[%s316 + $0xb8] sm:$0xff]
          %v845 = vld [vmem:[%s316 + $0xc0] sm:$0xff]
          %v846 = vld [vmem:[%s316 + $0xc8] sm:$0xff]
          %v847 = vld [vmem:[%s316 + $0xd0] sm:$0xff]
          %v848 = vld [vmem:[%s316 + $0xd8] sm:$0xff]
          %v849 = vld [vmem:[%s316 + $0xe0] sm:$0xff]
          %v850 = vld [vmem:[%s316 + $0xe8] sm:$0xff]
          %v851 = vld [vmem:[%s316 + $0xf0] sm:$0xff]
          %v852 = vld [vmem:[%s316 + $0xf8] sm:$0xff]
          %854 = vset.pattern.permute.xlu0 0
          %855 = vperm.xlu0 %854, %v821
          %v856 = vpop.permute.xlu0 %855
          %859 = vset.pattern.permute.xlu0 0
          %860 = vperm.xlu0 %859, %v822
          %v861 = vpop.permute.xlu0 %860
          %864 = vset.pattern.permute.xlu0 0
          %865 = vperm.xlu0 %864, %v823
          %v866 = vpop.permute.xlu0 %865
          %869 = vset.pattern.permute.xlu0 0
          %870 = vperm.xlu0 %869, %v824
          %v871 = vpop.permute.xlu0 %870
          %874 = vset.pattern.permute.xlu0 0
          %875 = vperm.xlu0 %874, %v825
          %v876 = vpop.permute.xlu0 %875
          %879 = vset.pattern.permute.xlu0 0
          %880 = vperm.xlu0 %879, %v826
          %v881 = vpop.permute.xlu0 %880
          %884 = vset.pattern.permute.xlu0 0
          %885 = vperm.xlu0 %884, %v827
          %v886 = vpop.permute.xlu0 %885
          %889 = vset.pattern.permute.xlu0 0
          %890 = vperm.xlu0 %889, %v828
          %v891 = vpop.permute.xlu0 %890
          %894 = vset.pattern.permute.xlu0 0
          %895 = vperm.xlu0 %894, %v829
          %v896 = vpop.permute.xlu0 %895
          %899 = vset.pattern.permute.xlu0 0
          %900 = vperm.xlu0 %899, %v830
          %v901 = vpop.permute.xlu0 %900
          %904 = vset.pattern.permute.xlu0 0
          %905 = vperm.xlu0 %904, %v831
          %v906 = vpop.permute.xlu0 %905
          %909 = vset.pattern.permute.xlu0 0
          %910 = vperm.xlu0 %909, %v832
          %v911 = vpop.permute.xlu0 %910
          %914 = vset.pattern.permute.xlu0 0
          %915 = vperm.xlu0 %914, %v833
          %v916 = vpop.permute.xlu0 %915
          %919 = vset.pattern.permute.xlu0 0
          %920 = vperm.xlu0 %919, %v834
          %v921 = vpop.permute.xlu0 %920
          %924 = vset.pattern.permute.xlu0 0
          %925 = vperm.xlu0 %924, %v835
          %v926 = vpop.permute.xlu0 %925
          %929 = vset.pattern.permute.xlu0 0
          %930 = vperm.xlu0 %929, %v836
          %v931 = vpop.permute.xlu0 %930
          %934 = vset.pattern.permute.xlu0 0
          %935 = vperm.xlu0 %934, %v837
          %v936 = vpop.permute.xlu0 %935
          %939 = vset.pattern.permute.xlu0 0
          %940 = vperm.xlu0 %939, %v838
          %v941 = vpop.permute.xlu0 %940
          %944 = vset.pattern.permute.xlu0 0
          %945 = vperm.xlu0 %944, %v839
          %v946 = vpop.permute.xlu0 %945
          %949 = vset.pattern.permute.xlu0 0
          %950 = vperm.xlu0 %949, %v840
          %v951 = vpop.permute.xlu0 %950
          %954 = vset.pattern.permute.xlu0 0
          %955 = vperm.xlu0 %954, %v841
          %v956 = vpop.permute.xlu0 %955
          %959 = vset.pattern.permute.xlu0 0
          %960 = vperm.xlu0 %959, %v842
          %v961 = vpop.permute.xlu0 %960
          %964 = vset.pattern.permute.xlu0 0
          %965 = vperm.xlu0 %964, %v843
          %v966 = vpop.permute.xlu0 %965
          %969 = vset.pattern.permute.xlu0 0
          %970 = vperm.xlu0 %969, %v844
          %v971 = vpop.permute.xlu0 %970
          %974 = vset.pattern.permute.xlu0 0
          %975 = vperm.xlu0 %974, %v845
          %v976 = vpop.permute.xlu0 %975
          %979 = vset.pattern.permute.xlu0 0
          %980 = vperm.xlu0 %979, %v846
          %v981 = vpop.permute.xlu0 %980
          %984 = vset.pattern.permute.xlu0 0
          %985 = vperm.xlu0 %984, %v847
          %v986 = vpop.permute.xlu0 %985
          %989 = vset.pattern.permute.xlu0 0
          %990 = vperm.xlu0 %989, %v848
          %v991 = vpop.permute.xlu0 %990
          %994 = vset.pattern.permute.xlu0 0
          %995 = vperm.xlu0 %994, %v849
          %v996 = vpop.permute.xlu0 %995
          %999 = vset.pattern.permute.xlu0 0
          %1000 = vperm.xlu0 %999, %v850
          %v1001 = vpop.permute.xlu0 %1000
          %1004 = vset.pattern.permute.xlu0 0
          %1005 = vperm.xlu0 %1004, %v851
          %v1006 = vpop.permute.xlu0 %1005
          %1009 = vset.pattern.permute.xlu0 0
          %1010 = vperm.xlu0 %1009, %v852
          %v1011 = vpop.permute.xlu0 %1010
          %v1013 = vmul.f32 %v789, %v856
          %v1014 = vmul.f32 %v790, %v861
          %v1015 = vmul.f32 %v791, %v866
          %v1016 = vmul.f32 %v792, %v871
          %v1017 = vmul.f32 %v793, %v876
          %v1018 = vmul.f32 %v794, %v881
          %v1019 = vmul.f32 %v795, %v886
          %v1020 = vmul.f32 %v796, %v891
          %v1021 = vmul.f32 %v797, %v896
          %v1022 = vmul.f32 %v798, %v901
          %v1023 = vmul.f32 %v799, %v906
          %v1024 = vmul.f32 %v800, %v911
          %v1025 = vmul.f32 %v801, %v916
          %v1026 = vmul.f32 %v802, %v921
          %v1027 = vmul.f32 %v803, %v926
          %v1028 = vmul.f32 %v804, %v931
          %v1029 = vmul.f32 %v805, %v936
          %v1030 = vmul.f32 %v806, %v941
          %v1031 = vmul.f32 %v807, %v946
          %v1032 = vmul.f32 %v808, %v951
          %v1033 = vmul.f32 %v809, %v956
          %v1034 = vmul.f32 %v810, %v961
          %v1035 = vmul.f32 %v811, %v966
          %v1036 = vmul.f32 %v812, %v971
          %v1037 = vmul.f32 %v813, %v976
          %v1038 = vmul.f32 %v814, %v981
          %v1039 = vmul.f32 %v815, %v986
          %v1040 = vmul.f32 %v816, %v991
          %v1041 = vmul.f32 %v817, %v996
          %v1042 = vmul.f32 %v818, %v1001
          %v1043 = vmul.f32 %v819, %v1006
          %v1044 = vmul.f32 %v820, %v1011
          %v1045 = vpack.c.bf16 %v1014, %v1013
          %v1046 = vpack.c.bf16 %v1016, %v1015
          %v1047 = vpack.c.bf16 %v1018, %v1017
          %v1048 = vpack.c.bf16 %v1020, %v1019
          %v1049 = vpack.c.bf16 %v1022, %v1021
          %v1050 = vpack.c.bf16 %v1024, %v1023
          %v1051 = vpack.c.bf16 %v1026, %v1025
          %v1052 = vpack.c.bf16 %v1028, %v1027
          %v1053 = vpack.c.bf16 %v1030, %v1029
          %v1054 = vpack.c.bf16 %v1032, %v1031
          %v1055 = vpack.c.bf16 %v1034, %v1033
          %v1056 = vpack.c.bf16 %v1036, %v1035
          %v1057 = vpack.c.bf16 %v1038, %v1037
          %v1058 = vpack.c.bf16 %v1040, %v1039
          %v1059 = vpack.c.bf16 %v1042, %v1041
          %v1060 = vpack.c.bf16 %v1044, %v1043
          %v1061 = vld [vmem:[%s308] sm:$0xf]
          %v1062 = vld [vmem:[%s308 + $0x4] sm:$0xf]
          %v1063 = vld [vmem:[%s308 + $0x8] sm:$0xf]
          %v1064 = vld [vmem:[%s308 + $0xc] sm:$0xf]
          %v1065 = vld [vmem:[%s308 + $0x10] sm:$0xf]
          %v1066 = vld [vmem:[%s308 + $0x14] sm:$0xf]
          %v1067 = vld [vmem:[%s308 + $0x18] sm:$0xf]
          %v1068 = vld [vmem:[%s308 + $0x1c] sm:$0xf]
          %v1069 = vld [vmem:[%s308 + $0x20] sm:$0xf]
          %v1070 = vld [vmem:[%s308 + $0x24] sm:$0xf]
          %v1071 = vld [vmem:[%s308 + $0x28] sm:$0xf]
          %v1072 = vld [vmem:[%s308 + $0x2c] sm:$0xf]
          %v1073 = vld [vmem:[%s308 + $0x30] sm:$0xf]
          %v1074 = vld [vmem:[%s308 + $0x34] sm:$0xf]
          %v1075 = vld [vmem:[%s308 + $0x38] sm:$0xf]
          %v1076 = vld [vmem:[%s308 + $0x3c] sm:$0xf]
          %v1077 = vld [vmem:[%s311] sm:$0x1]
          %v1079 = vlaneseq
          %v1080 = vshrl.u32 %v1079, 7
          %v1081 = vsub.s32 0, %v1080
          %v1082 = vrot.slane %v1077, %v1081
          %v1100 = vunpack.c.l.b16 %v1061
          %v1101 = vunpack.c.l.b16 %v1062
          %v1102 = vunpack.c.l.b16 %v1063
          %v1103 = vunpack.c.l.b16 %v1064
          %v1104 = vunpack.c.l.b16 %v1065
          %v1105 = vunpack.c.l.b16 %v1066
          %v1106 = vunpack.c.l.b16 %v1067
          %v1107 = vunpack.c.l.b16 %v1068
          %v1108 = vunpack.c.l.b16 %v1069
          %v1109 = vunpack.c.l.b16 %v1070
          %v1110 = vunpack.c.l.b16 %v1071
          %v1111 = vunpack.c.l.b16 %v1072
          %v1112 = vunpack.c.l.b16 %v1073
          %v1113 = vunpack.c.l.b16 %v1074
          %v1114 = vunpack.c.l.b16 %v1075
          %v1115 = vunpack.c.l.b16 %v1076
          %v1116 = vpack.c.b16 %v1101, %v1100
          %v1117 = vpack.c.b16 %v1103, %v1102
          %v1118 = vpack.c.b16 %v1105, %v1104
          %v1119 = vpack.c.b16 %v1107, %v1106
          %v1120 = vpack.c.b16 %v1109, %v1108
          %v1121 = vpack.c.b16 %v1111, %v1110
          %v1122 = vpack.c.b16 %v1113, %v1112
          %v1123 = vpack.c.b16 %v1115, %v1114
          %1132 = vmatprep.subr.bf16.mxu0 0
          %1133 = vmatpush1.bf16.msra.mxu0 %v1116
          %1134 = vmatprep.subr.bf16.mxu0 0
          %1135 = vmatpush1.bf16.msra.mxu0 %v1117
          %1136 = vmatprep.subr.bf16.mxu0 0
          %1137 = vmatpush1.bf16.msra.mxu0 %v1118
          %1138 = vmatprep.subr.bf16.mxu0 0
          %1139 = vmatpush1.bf16.msra.mxu0 %v1119
          %1140 = vmatprep.subr.bf16.mxu0 0
          %1141 = vmatpush1.bf16.msra.mxu0 %v1120
          %1142 = vmatprep.subr.bf16.mxu0 0
          %1143 = vmatpush1.bf16.msra.mxu0 %v1121
          %1144 = vmatprep.subr.bf16.mxu0 0
          %1145 = vmatpush1.bf16.msra.mxu0 %v1122
          %1146 = vmatprep.subr.bf16.mxu0 0
          %1147 = vmatpush1.bf16.msra.mxu0 %v1123
          %1148 = vmatprep.subr.bf16.mxu0 0
          %1149 = vmatpush1.bf16.msra.mxu0 0
          %1150 = vmatprep.subr.bf16.mxu0 0
          %1151 = vmatpush1.bf16.msra.mxu0 0
          %1152 = vmatprep.subr.bf16.mxu0 0
          %1153 = vmatpush1.bf16.msra.mxu0 0
          %1154 = vmatprep.subr.bf16.mxu0 0
          %1155 = vmatpush1.bf16.msra.mxu0 0
          %1156 = vmatprep.subr.bf16.mxu0 0
          %1157 = vmatpush1.bf16.msra.mxu0 0
          %1158 = vmatprep.subr.bf16.mxu0 0
          %1159 = vmatpush1.bf16.msra.mxu0 0
          %1160 = vmatprep.subr.bf16.mxu0 0
          %1161 = vmatpush1.bf16.msra.mxu0 0
          %1162 = vmatprep.subr.bf16.mxu0 0
          %1163 = vmatpush1.bf16.msra.mxu0 0
          %1164 = vmatprep.mubr.bf16.mxu0 0
          %1165 = vmatmul.mubr.bf16.gmra.mrb[0].mxu0 %v1045
          %v1166 = vpop.f32.mrb[0].mxu0
          %v1167 = vadd.f32 %v1082, %v1166
          %v1168 = vpop.f32.mrb[0].mxu0
          %v1169 = vpop.f32.mrb[0].mxu0
          %v1170 = vadd.f32 %v1082, %v1169
          %v1171 = vpop.f32.mrb[0].mxu0
          %1172 = vmatprep.mubr.bf16.mxu0 0
          %1173 = vmatmul.mubr.bf16.gmra.mrb[0].mxu0 %v1046
          %v1174 = vpop.f32.mrb[0].mxu0
          %v1175 = vadd.f32 %v1082, %v1174
          %v1176 = vpop.f32.mrb[0].mxu0
          %v1177 = vpop.f32.mrb[0].mxu0
          %v1178 = vadd.f32 %v1082, %v1177
          %v1179 = vpop.f32.mrb[0].mxu0
          %1180 = vmatprep.mubr.bf16.mxu0 0
          %1181 = vmatmul.mubr.bf16.gmra.mrb[0].mxu0 %v1047
          %v1182 = vpop.f32.mrb[0].mxu0
          %v1183 = vadd.f32 %v1082, %v1182
          %v1184 = vpop.f32.mrb[0].mxu0
          %v1185 = vpop.f32.mrb[0].mxu0
          %v1186 = vadd.f32 %v1082, %v1185
          %v1187 = vpop.f32.mrb[0].mxu0
          %1188 = vmatprep.mubr.bf16.mxu0 0
          %1189 = vmatmul.mubr.bf16.gmra.mrb[0].mxu0 %v1048
          %v1190 = vpop.f32.mrb[0].mxu0
          %v1191 = vadd.f32 %v1082, %v1190
          %v1192 = vpop.f32.mrb[0].mxu0
          %v1193 = vpop.f32.mrb[0].mxu0
          %v1194 = vadd.f32 %v1082, %v1193
          %v1195 = vpop.f32.mrb[0].mxu0
          %1196 = vmatprep.mubr.bf16.mxu0 0
          %1197 = vmatmul.mubr.bf16.gmra.mrb[0].mxu0 %v1049
          %v1198 = vpop.f32.mrb[0].mxu0
          %v1199 = vadd.f32 %v1082, %v1198
          %v1200 = vpop.f32.mrb[0].mxu0
          %v1201 = vpop.f32.mrb[0].mxu0
          %v1202 = vadd.f32 %v1082, %v1201
          %v1203 = vpop.f32.mrb[0].mxu0
          %1204 = vmatprep.mubr.bf16.mxu0 0
          %1205 = vmatmul.mubr.bf16.gmra.mrb[0].mxu0 %v1050
          %v1206 = vpop.f32.mrb[0].mxu0
          %v1207 = vadd.f32 %v1082, %v1206
          %v1208 = vpop.f32.mrb[0].mxu0
          %v1209 = vpop.f32.mrb[0].mxu0
          %v1210 = vadd.f32 %v1082, %v1209
          %v1211 = vpop.f32.mrb[0].mxu0
          %1212 = vmatprep.mubr.bf16.mxu0 0
          %1213 = vmatmul.mubr.bf16.gmra.mrb[0].mxu0 %v1051
          %v1214 = vpop.f32.mrb[0].mxu0
          %v1215 = vadd.f32 %v1082, %v1214
          %v1216 = vpop.f32.mrb[0].mxu0
          %v1217 = vpop.f32.mrb[0].mxu0
          %v1218 = vadd.f32 %v1082, %v1217
          %v1219 = vpop.f32.mrb[0].mxu0
          %1220 = vmatprep.mubr.bf16.mxu0 0
          %1221 = vmatmul.mubr.bf16.gmra.mrb[0].mxu0 %v1052
          %v1222 = vpop.f32.mrb[0].mxu0
          %v1223 = vadd.f32 %v1082, %v1222
          %v1224 = vpop.f32.mrb[0].mxu0
          %v1225 = vpop.f32.mrb[0].mxu0
          %v1226 = vadd.f32 %v1082, %v1225
          %v1227 = vpop.f32.mrb[0].mxu0
          %1228 = vmatprep.mubr.bf16.mxu0 0
          %1229 = vmatmul.mubr.bf16.gmra.mrb[0].mxu0 %v1053
          %v1230 = vpop.f32.mrb[0].mxu0
          %v1231 = vadd.f32 %v1082, %v1230
          %v1232 = vpop.f32.mrb[0].mxu0
          %v1233 = vpop.f32.mrb[0].mxu0
          %v1234 = vadd.f32 %v1082, %v1233
          %v1235 = vpop.f32.mrb[0].mxu0
          %1236 = vmatprep.mubr.bf16.mxu0 0
          %1237 = vmatmul.mubr.bf16.gmra.mrb[0].mxu0 %v1054
          %v1238 = vpop.f32.mrb[0].mxu0
          %v1239 = vadd.f32 %v1082, %v1238
          %v1240 = vpop.f32.mrb[0].mxu0
          %v1241 = vpop.f32.mrb[0].mxu0
          %v1242 = vadd.f32 %v1082, %v1241
          %v1243 = vpop.f32.mrb[0].mxu0
          %1244 = vmatprep.mubr.bf16.mxu0 0
          %1245 = vmatmul.mubr.bf16.gmra.mrb[0].mxu0 %v1055
          %v1246 = vpop.f32.mrb[0].mxu0
          %v1247 = vadd.f32 %v1082, %v1246
          %v1248 = vpop.f32.mrb[0].mxu0
          %v1249 = vpop.f32.mrb[0].mxu0
          %v1250 = vadd.f32 %v1082, %v1249
          %v1251 = vpop.f32.mrb[0].mxu0
          %1252 = vmatprep.mubr.bf16.mxu0 0
          %1253 = vmatmul.mubr.bf16.gmra.mrb[0].mxu0 %v1056
          %v1254 = vpop.f32.mrb[0].mxu0
          %v1255 = vadd.f32 %v1082, %v1254
          %v1256 = vpop.f32.mrb[0].mxu0
          %v1257 = vpop.f32.mrb[0].mxu0
          %v1258 = vadd.f32 %v1082, %v1257
          %v1259 = vpop.f32.mrb[0].mxu0
          %1260 = vmatprep.mubr.bf16.mxu0 0
          %1261 = vmatmul.mubr.bf16.gmra.mrb[0].mxu0 %v1057
          %v1262 = vpop.f32.mrb[0].mxu0
          %v1263 = vadd.f32 %v1082, %v1262
          %v1264 = vpop.f32.mrb[0].mxu0
          %v1265 = vpop.f32.mrb[0].mxu0
          %v1266 = vadd.f32 %v1082, %v1265
          %v1267 = vpop.f32.mrb[0].mxu0
          %1268 = vmatprep.mubr.bf16.mxu0 0
          %1269 = vmatmul.mubr.bf16.gmra.mrb[0].mxu0 %v1058
          %v1270 = vpop.f32.mrb[0].mxu0
          %v1271 = vadd.f32 %v1082, %v1270
          %v1272 = vpop.f32.mrb[0].mxu0
          %v1273 = vpop.f32.mrb[0].mxu0
          %v1274 = vadd.f32 %v1082, %v1273
          %v1275 = vpop.f32.mrb[0].mxu0
          %1276 = vmatprep.mubr.bf16.mxu0 0
          %1277 = vmatmul.mubr.bf16.gmra.mrb[0].mxu0 %v1059
          %v1278 = vpop.f32.mrb[0].mxu0
          %v1279 = vadd.f32 %v1082, %v1278
          %v1280 = vpop.f32.mrb[0].mxu0
          %v1281 = vpop.f32.mrb[0].mxu0
          %v1282 = vadd.f32 %v1082, %v1281
          %v1283 = vpop.f32.mrb[0].mxu0
          %1284 = vmatprep.mubr.bf16.mxu0 0
          %1285 = vmatmul.mubr.bf16.gmra.mrb[0].mxu0 %v1060
          %v1286 = vpop.f32.mrb[0].mxu0
          %v1287 = vadd.f32 %v1082, %v1286
          %v1288 = vpop.f32.mrb[0].mxu0
          %v1289 = vpop.f32.mrb[0].mxu0
          %v1290 = vadd.f32 %v1082, %v1289
          %v1291 = vpop.f32.mrb[0].mxu0
          %1292 = vdwg.mxu0
          %p1293 = scmp.lt.s32.totalorder %s21, 2
          // Predicated region
          $region121: #{tpu_custom_call.1} parent=119 // pred_check
            %p1294 = pneg %p1293
          $region122: #{tpu_custom_call.1} parent=119 // pred_check_branch
            %1296 = sbr.rel (%p1294) target = $region124
          $region123: #{tpu_custom_call.1} parent=119 // pred_region
            %v1297 = vmax.f32 %v1167, 0.0
            %v1298 = vmax.f32 %v1170, 0.0
            %v1299 = vmax.f32 %v1175, 0.0
            %v1300 = vmax.f32 %v1178, 0.0
            %v1301 = vmax.f32 %v1183, 0.0
            %v1302 = vmax.f32 %v1186, 0.0
            %v1303 = vmax.f32 %v1191, 0.0
            %v1304 = vmax.f32 %v1194, 0.0
            %v1305 = vmax.f32 %v1199, 0.0
            %v1306 = vmax.f32 %v1202, 0.0
            %v1307 = vmax.f32 %v1207, 0.0
            %v1308 = vmax.f32 %v1210, 0.0
            %v1309 = vmax.f32 %v1215, 0.0
            %v1310 = vmax.f32 %v1218, 0.0
            %v1311 = vmax.f32 %v1223, 0.0
            %v1312 = vmax.f32 %v1226, 0.0
            %v1313 = vmax.f32 %v1231, 0.0
            %v1314 = vmax.f32 %v1234, 0.0
            %v1315 = vmax.f32 %v1239, 0.0
            %v1316 = vmax.f32 %v1242, 0.0
            %v1317 = vmax.f32 %v1247, 0.0
            %v1318 = vmax.f32 %v1250, 0.0
            %v1319 = vmax.f32 %v1255, 0.0
            %v1320 = vmax.f32 %v1258, 0.0
            %v1321 = vmax.f32 %v1263, 0.0
            %v1322 = vmax.f32 %v1266, 0.0
            %v1323 = vmax.f32 %v1271, 0.0
            %v1324 = vmax.f32 %v1274, 0.0
            %v1325 = vmax.f32 %v1279, 0.0
            %v1326 = vmax.f32 %v1282, 0.0
            %v1327 = vmax.f32 %v1287, 0.0
            %v1328 = vmax.f32 %v1290, 0.0
            %v1329 = vpack.c.bf16 %v1298, %v1297
            %v1330 = vpack.c.bf16 %v1300, %v1299
            %v1331 = vpack.c.bf16 %v1302, %v1301
            %v1332 = vpack.c.bf16 %v1304, %v1303
            %v1333 = vpack.c.bf16 %v1306, %v1305
            %v1334 = vpack.c.bf16 %v1308, %v1307
            %v1335 = vpack.c.bf16 %v1310, %v1309
            %v1336 = vpack.c.bf16 %v1312, %v1311
            %v1337 = vpack.c.bf16 %v1314, %v1313
            %v1338 = vpack.c.bf16 %v1316, %v1315
            %v1339 = vpack.c.bf16 %v1318, %v1317
            %v1340 = vpack.c.bf16 %v1320, %v1319
            %v1341 = vpack.c.bf16 %v1322, %v1321
            %v1342 = vpack.c.bf16 %v1324, %v1323
            %v1343 = vpack.c.bf16 %v1326, %v1325
            %v1344 = vpack.c.bf16 %v1328, %v1327
            %v1361 = vunpack.c.l.b16 %v1329
            %v1362 = vunpack.c.h.b16 %v1329
            %v1363 = vunpack.c.l.b16 %v1330
            %v1364 = vunpack.c.h.b16 %v1330
            %v1365 = vunpack.c.l.b16 %v1331
            %v1366 = vunpack.c.h.b16 %v1331
            %v1367 = vunpack.c.l.b16 %v1332
            %v1368 = vunpack.c.h.b16 %v1332
            %v1369 = vunpack.c.l.b16 %v1333
            %v1370 = vunpack.c.h.b16 %v1333
            %v1371 = vunpack.c.l.b16 %v1334
            %v1372 = vunpack.c.h.b16 %v1334
            %v1373 = vunpack.c.l.b16 %v1335
            %v1374 = vunpack.c.h.b16 %v1335
            %v1375 = vunpack.c.l.b16 %v1336
            %v1376 = vunpack.c.h.b16 %v1336
            %v1377 = vunpack.c.l.b16 %v1337
            %v1378 = vunpack.c.h.b16 %v1337
            %v1379 = vunpack.c.l.b16 %v1338
            %v1380 = vunpack.c.h.b16 %v1338
            %v1381 = vunpack.c.l.b16 %v1339
            %v1382 = vunpack.c.h.b16 %v1339
            %v1383 = vunpack.c.l.b16 %v1340
            %v1384 = vunpack.c.h.b16 %v1340
            %v1385 = vunpack.c.l.b16 %v1341
            %v1386 = vunpack.c.h.b16 %v1341
            %v1387 = vunpack.c.l.b16 %v1342
            %v1388 = vunpack.c.h.b16 %v1342
            %v1389 = vunpack.c.l.b16 %v1343
            %v1390 = vunpack.c.h.b16 %v1343
            %v1391 = vunpack.c.l.b16 %v1344
            %v1392 = vunpack.c.h.b16 %v1344
            %v1393 = vpack.c.b16 %v1361, %v1361
            %v1394 = vpack.c.b16 %v1362, %v1362
            %v1395 = vpack.c.b16 %v1363, %v1363
            %v1396 = vpack.c.b16 %v1364, %v1364
            %v1397 = vpack.c.b16 %v1365, %v1365
            %v1398 = vpack.c.b16 %v1366, %v1366
            %v1399 = vpack.c.b16 %v1367, %v1367
            %v1400 = vpack.c.b16 %v1368, %v1368
            %v1401 = vpack.c.b16 %v1369, %v1369
            %v1402 = vpack.c.b16 %v1370, %v1370
            %v1403 = vpack.c.b16 %v1371, %v1371
            %v1404 = vpack.c.b16 %v1372, %v1372
            %v1405 = vpack.c.b16 %v1373, %v1373
            %v1406 = vpack.c.b16 %v1374, %v1374
            %v1407 = vpack.c.b16 %v1375, %v1375
            %v1408 = vpack.c.b16 %v1376, %v1376
            %v1409 = vpack.c.b16 %v1377, %v1377
            %v1410 = vpack.c.b16 %v1378, %v1378
            %v1411 = vpack.c.b16 %v1379, %v1379
            %v1412 = vpack.c.b16 %v1380, %v1380
            %v1413 = vpack.c.b16 %v1381, %v1381
            %v1414 = vpack.c.b16 %v1382, %v1382
            %v1415 = vpack.c.b16 %v1383, %v1383
            %v1416 = vpack.c.b16 %v1384, %v1384
            %v1417 = vpack.c.b16 %v1385, %v1385
            %v1418 = vpack.c.b16 %v1386, %v1386
            %v1419 = vpack.c.b16 %v1387, %v1387
            %v1420 = vpack.c.b16 %v1388, %v1388
            %v1421 = vpack.c.b16 %v1389, %v1389
            %v1422 = vpack.c.b16 %v1390, %v1390
            %v1423 = vpack.c.b16 %v1391, %v1391
            %v1424 = vpack.c.b16 %v1392, %v1392
            %1457 = vst [vmem:[#allocation5] sm:$0xf] %v1393
            %1458 = vst [vmem:[#allocation5 + $0x4] sm:$0xf] %v1394
            %1459 = vst [vmem:[#allocation5 + $0x8] sm:$0xf] %v1395
            %1460 = vst [vmem:[#allocation5 + $0xc] sm:$0xf] %v1396
            %1461 = vst [vmem:[#allocation5 + $0x10] sm:$0xf] %v1397
            %1462 = vst [vmem:[#allocation5 + $0x14] sm:$0xf] %v1398
            %1463 = vst [vmem:[#allocation5 + $0x18] sm:$0xf] %v1399
            %1464 = vst [vmem:[#allocation5 + $0x1c] sm:$0xf] %v1400
            %1465 = vst [vmem:[#allocation5 + $0x20] sm:$0xf] %v1401
            %1466 = vst [vmem:[#allocation5 + $0x24] sm:$0xf] %v1402
            %1467 = vst [vmem:[#allocation5 + $0x28] sm:$0xf] %v1403
            %1468 = vst [vmem:[#allocation5 + $0x2c] sm:$0xf] %v1404
            %1469 = vst [vmem:[#allocation5 + $0x30] sm:$0xf] %v1405
            %1470 = vst [vmem:[#allocation5 + $0x34] sm:$0xf] %v1406
            %1471 = vst [vmem:[#allocation5 + $0x38] sm:$0xf] %v1407
            %1472 = vst [vmem:[#allocation5 + $0x3c] sm:$0xf] %v1408
            %1473 = vst [vmem:[#allocation5 + $0x40] sm:$0xf] %v1409
            %1474 = vst [vmem:[#allocation5 + $0x44] sm:$0xf] %v1410
            %1475 = vst [vmem:[#allocation5 + $0x48] sm:$0xf] %v1411
            %1476 = vst [vmem:[#allocation5 + $0x4c] sm:$0xf] %v1412
            %1477 = vst [vmem:[#allocation5 + $0x50] sm:$0xf] %v1413
            %1478 = vst [vmem:[#allocation5 + $0x54] sm:$0xf] %v1414
            %1479 = vst [vmem:[#allocation5 + $0x58] sm:$0xf] %v1415
            %1480 = vst [vmem:[#allocation5 + $0x5c] sm:$0xf] %v1416
            %1481 = vst [vmem:[#allocation5 + $0x60] sm:$0xf] %v1417
            %1482 = vst [vmem:[#allocation5 + $0x64] sm:$0xf] %v1418
            %1483 = vst [vmem:[#allocation5 + $0x68] sm:$0xf] %v1419
            %1484 = vst [vmem:[#allocation5 + $0x6c] sm:$0xf] %v1420
            %1485 = vst [vmem:[#allocation5 + $0x70] sm:$0xf] %v1421
            %1486 = vst [vmem:[#allocation5 + $0x74] sm:$0xf] %v1422
            %1487 = vst [vmem:[#allocation5 + $0x78] sm:$0xf] %v1423
            %1488 = vst [vmem:[#allocation5 + $0x7c] sm:$0xf] %v1424
          $region124: #{tpu_custom_call.1} parent=119 // pred_fallthru
            _
          %p1489 = scmp.eq.s32.totalorder %s21, 2
          // Predicated region
          $region125: #{tpu_custom_call.1} parent=119 // pred_check
            %p1490 = pneg %p1489
          $region126: #{tpu_custom_call.1} parent=119 // pred_check_branch
            %1492 = sbr.rel (%p1490) target = $region128
          $region127: #{tpu_custom_call.1} parent=119 // pred_region
            %v1493 = vlaneseq
            %v1494 = vand.u32 %v1493, 127
            %vm1495 = vcmp.lt.s32.totalorder %v1494, 8
            %v1496 = vsel %vm1495, %v1167, -1e+30
            %v1497 = vsel %vm1495, %v1170, -1e+30
            %v1498 = vsel %vm1495, %v1175, -1e+30
            %v1499 = vsel %vm1495, %v1178, -1e+30
            %v1500 = vsel %vm1495, %v1183, -1e+30
            %v1501 = vsel %vm1495, %v1186, -1e+30
            %v1502 = vsel %vm1495, %v1191, -1e+30
            %v1503 = vsel %vm1495, %v1194, -1e+30
            %v1504 = vsel %vm1495, %v1199, -1e+30
            %v1505 = vsel %vm1495, %v1202, -1e+30
            %v1506 = vsel %vm1495, %v1207, -1e+30
            %v1507 = vsel %vm1495, %v1210, -1e+30
            %v1508 = vsel %vm1495, %v1215, -1e+30
            %v1509 = vsel %vm1495, %v1218, -1e+30
            %v1510 = vsel %vm1495, %v1223, -1e+30
            %v1511 = vsel %vm1495, %v1226, -1e+30
            %v1512 = vsel %vm1495, %v1231, -1e+30
            %v1513 = vsel %vm1495, %v1234, -1e+30
            %v1514 = vsel %vm1495, %v1239, -1e+30
            %v1515 = vsel %vm1495, %v1242, -1e+30
            %v1516 = vsel %vm1495, %v1247, -1e+30
            %v1517 = vsel %vm1495, %v1250, -1e+30
            %v1518 = vsel %vm1495, %v1255, -1e+30
            %v1519 = vsel %vm1495, %v1258, -1e+30
            %v1520 = vsel %vm1495, %v1263, -1e+30
            %v1521 = vsel %vm1495, %v1266, -1e+30
            %v1522 = vsel %vm1495, %v1271, -1e+30
            %v1523 = vsel %vm1495, %v1274, -1e+30
            %v1524 = vsel %vm1495, %v1279, -1e+30
            %v1525 = vsel %vm1495, %v1282, -1e+30
            %v1526 = vsel %vm1495, %v1287, -1e+30
            %v1527 = vsel %vm1495, %v1290, -1e+30
            %1528 = vmax.xlane.f32.xlu0 %v1496
            %v1529 = vpop.xlane.xlu0 %1528
            %1530 = vmax.xlane.f32.xlu0 %v1497
            %v1531 = vpop.xlane.xlu0 %1530
            %1532 = vmax.xlane.f32.xlu0 %v1498
            %v1533 = vpop.xlane.xlu0 %1532
            %1534 = vmax.xlane.f32.xlu0 %v1499
            %v1535 = vpop.xlane.xlu0 %1534
            %1536 = vmax.xlane.f32.xlu0 %v1500
            %v1537 = vpop.xlane.xlu0 %1536
            %1538 = vmax.xlane.f32.xlu0 %v1501
            %v1539 = vpop.xlane.xlu0 %1538
            %1540 = vmax.xlane.f32.xlu0 %v1502
            %v1541 = vpop.xlane.xlu0 %1540
            %1542 = vmax.xlane.f32.xlu0 %v1503
            %v1543 = vpop.xlane.xlu0 %1542
            %1544 = vmax.xlane.f32.xlu0 %v1504
            %v1545 = vpop.xlane.xlu0 %1544
            %1546 = vmax.xlane.f32.xlu0 %v1505
            %v1547 = vpop.xlane.xlu0 %1546
            %1548 = vmax.xlane.f32.xlu0 %v1506
            %v1549 = vpop.xlane.xlu0 %1548
            %1550 = vmax.xlane.f32.xlu0 %v1507
            %v1551 = vpop.xlane.xlu0 %1550
            %1552 = vmax.xlane.f32.xlu0 %v1508
            %v1553 = vpop.xlane.xlu0 %1552
            %1554 = vmax.xlane.f32.xlu0 %v1509
            %v1555 = vpop.xlane.xlu0 %1554
            %1556 = vmax.xlane.f32.xlu0 %v1510
            %v1557 = vpop.xlane.xlu0 %1556
            %1558 = vmax.xlane.f32.xlu0 %v1511
            %v1559 = vpop.xlane.xlu0 %1558
            %1560 = vmax.xlane.f32.xlu0 %v1512
            %v1561 = vpop.xlane.xlu0 %1560
            %1562 = vmax.xlane.f32.xlu0 %v1513
            %v1563 = vpop.xlane.xlu0 %1562
            %1564 = vmax.xlane.f32.xlu0 %v1514
            %v1565 = vpop.xlane.xlu0 %1564
            %1566 = vmax.xlane.f32.xlu0 %v1515
            %v1567 = vpop.xlane.xlu0 %1566
            %1568 = vmax.xlane.f32.xlu0 %v1516
            %v1569 = vpop.xlane.xlu0 %1568
            %1570 = vmax.xlane.f32.xlu0 %v1517
            %v1571 = vpop.xlane.xlu0 %1570
            %1572 = vmax.xlane.f32.xlu0 %v1518
            %v1573 = vpop.xlane.xlu0 %1572
            %1574 = vmax.xlane.f32.xlu0 %v1519
            %v1575 = vpop.xlane.xlu0 %1574
            %1576 = vmax.xlane.f32.xlu0 %v1520
            %v1577 = vpop.xlane.xlu0 %1576
            %1578 = vmax.xlane.f32.xlu0 %v1521
            %v1579 = vpop.xlane.xlu0 %1578
            %1580 = vmax.xlane.f32.xlu0 %v1522
            %v1581 = vpop.xlane.xlu0 %1580
            %1582 = vmax.xlane.f32.xlu0 %v1523
            %v1583 = vpop.xlane.xlu0 %1582
            %1584 = vmax.xlane.f32.xlu0 %v1524
            %v1585 = vpop.xlane.xlu0 %1584
            %1586 = vmax.xlane.f32.xlu0 %v1525
            %v1587 = vpop.xlane.xlu0 %1586
            %1588 = vmax.xlane.f32.xlu0 %v1526
            %v1589 = vpop.xlane.xlu0 %1588
            %1590 = vmax.xlane.f32.xlu0 %v1527
            %v1591 = vpop.xlane.xlu0 %1590
            %v1592 = vsub.f32 %v1496, %v1529
            %v1593 = vsub.f32 %v1497, %v1531
            %v1594 = vsub.f32 %v1498, %v1533
            %v1595 = vsub.f32 %v1499, %v1535
            %v1596 = vsub.f32 %v1500, %v1537
            %v1597 = vsub.f32 %v1501, %v1539
            %v1598 = vsub.f32 %v1502, %v1541
            %v1599 = vsub.f32 %v1503, %v1543
            %v1600 = vsub.f32 %v1504, %v1545
            %v1601 = vsub.f32 %v1505, %v1547
            %v1602 = vsub.f32 %v1506, %v1549
            %v1603 = vsub.f32 %v1507, %v1551
            %v1604 = vsub.f32 %v1508, %v1553
            %v1605 = vsub.f32 %v1509, %v1555
            %v1606 = vsub.f32 %v1510, %v1557
            %v1607 = vsub.f32 %v1511, %v1559
            %v1608 = vsub.f32 %v1512, %v1561
            %v1609 = vsub.f32 %v1513, %v1563
            %v1610 = vsub.f32 %v1514, %v1565
            %v1611 = vsub.f32 %v1515, %v1567
            %v1612 = vsub.f32 %v1516, %v1569
            %v1613 = vsub.f32 %v1517, %v1571
            %v1614 = vsub.f32 %v1518, %v1573
            %v1615 = vsub.f32 %v1519, %v1575
            %v1616 = vsub.f32 %v1520, %v1577
            %v1617 = vsub.f32 %v1521, %v1579
            %v1618 = vsub.f32 %v1522, %v1581
            %v1619 = vsub.f32 %v1523, %v1583
            %v1620 = vsub.f32 %v1524, %v1585
            %v1621 = vsub.f32 %v1525, %v1587
            %v1622 = vsub.f32 %v1526, %v1589
            %v1623 = vsub.f32 %v1527, %v1591
            %v1624 = vmul.f32 %v1592, 1.442695
            %v1625 = vpow.pop %v1624
            %v1626 = vmul.f32 %v1593, 1.442695
            %v1627 = vpow.pop %v1626
            %v1628 = vmul.f32 %v1594, 1.442695
            %v1629 = vpow.pop %v1628
            %v1630 = vmul.f32 %v1595, 1.442695
            %v1631 = vpow.pop %v1630
            %v1632 = vmul.f32 %v1596, 1.442695
            %v1633 = vpow.pop %v1632
            %v1634 = vmul.f32 %v1597, 1.442695
            %v1635 = vpow.pop %v1634
            %v1636 = vmul.f32 %v1598, 1.442695
            %v1637 = vpow.pop %v1636
            %v1638 = vmul.f32 %v1599, 1.442695
            %v1639 = vpow.pop %v1638
            %v1640 = vmul.f32 %v1600, 1.442695
            %v1641 = vpow.pop %v1640
            %v1642 = vmul.f32 %v1601, 1.442695
            %v1643 = vpow.pop %v1642
            %v1644 = vmul.f32 %v1602, 1.442695
            %v1645 = vpow.pop %v1644
            %v1646 = vmul.f32 %v1603, 1.442695
            %v1647 = vpow.pop %v1646
            %v1648 = vmul.f32 %v1604, 1.442695
            %v1649 = vpow.pop %v1648
            %v1650 = vmul.f32 %v1605, 1.442695
            %v1651 = vpow.pop %v1650
            %v1652 = vmul.f32 %v1606, 1.442695
            %v1653 = vpow.pop %v1652
            %v1654 = vmul.f32 %v1607, 1.442695
            %v1655 = vpow.pop %v1654
            %v1656 = vmul.f32 %v1608, 1.442695
            %v1657 = vpow.pop %v1656
            %v1658 = vmul.f32 %v1609, 1.442695
            %v1659 = vpow.pop %v1658
            %v1660 = vmul.f32 %v1610, 1.442695
            %v1661 = vpow.pop %v1660
            %v1662 = vmul.f32 %v1611, 1.442695
            %v1663 = vpow.pop %v1662
            %v1664 = vmul.f32 %v1612, 1.442695
            %v1665 = vpow.pop %v1664
            %v1666 = vmul.f32 %v1613, 1.442695
            %v1667 = vpow.pop %v1666
            %v1668 = vmul.f32 %v1614, 1.442695
            %v1669 = vpow.pop %v1668
            %v1670 = vmul.f32 %v1615, 1.442695
            %v1671 = vpow.pop %v1670
            %v1672 = vmul.f32 %v1616, 1.442695
            %v1673 = vpow.pop %v1672
            %v1674 = vmul.f32 %v1617, 1.442695
            %v1675 = vpow.pop %v1674
            %v1676 = vmul.f32 %v1618, 1.442695
            %v1677 = vpow.pop %v1676
            %v1678 = vmul.f32 %v1619, 1.442695
            %v1679 = vpow.pop %v1678
            %v1680 = vmul.f32 %v1620, 1.442695
            %v1681 = vpow.pop %v1680
            %v1682 = vmul.f32 %v1621, 1.442695
            %v1683 = vpow.pop %v1682
            %v1684 = vmul.f32 %v1622, 1.442695
            %v1685 = vpow.pop %v1684
            %v1686 = vmul.f32 %v1623, 1.442695
            %v1687 = vpow.pop %v1686
            %1688 = vadd.xlane.f32.xlu0 %v1625
            %v1689 = vpop.xlane.xlu0 %1688
            %1690 = vadd.xlane.f32.xlu0 %v1627
            %v1691 = vpop.xlane.xlu0 %1690
            %1692 = vadd.xlane.f32.xlu0 %v1629
            %v1693 = vpop.xlane.xlu0 %1692
            %1694 = vadd.xlane.f32.xlu0 %v1631
            %v1695 = vpop.xlane.xlu0 %1694
            %1696 = vadd.xlane.f32.xlu0 %v1633
            %v1697 = vpop.xlane.xlu0 %1696
            %1698 = vadd.xlane.f32.xlu0 %v1635
            %v1699 = vpop.xlane.xlu0 %1698
            %1700 = vadd.xlane.f32.xlu0 %v1637
            %v1701 = vpop.xlane.xlu0 %1700
            %1702 = vadd.xlane.f32.xlu0 %v1639
            %v1703 = vpop.xlane.xlu0 %1702
            %1704 = vadd.xlane.f32.xlu0 %v1641
            %v1705 = vpop.xlane.xlu0 %1704
            %1706 = vadd.xlane.f32.xlu0 %v1643
            %v1707 = vpop.xlane.xlu0 %1706
            %1708 = vadd.xlane.f32.xlu0 %v1645
            %v1709 = vpop.xlane.xlu0 %1708
            %1710 = vadd.xlane.f32.xlu0 %v1647
            %v1711 = vpop.xlane.xlu0 %1710
            %1712 = vadd.xlane.f32.xlu0 %v1649
            %v1713 = vpop.xlane.xlu0 %1712
            %1714 = vadd.xlane.f32.xlu0 %v1651
            %v1715 = vpop.xlane.xlu0 %1714
            %1716 = vadd.xlane.f32.xlu0 %v1653
            %v1717 = vpop.xlane.xlu0 %1716
            %1718 = vadd.xlane.f32.xlu0 %v1655
            %v1719 = vpop.xlane.xlu0 %1718
            %1720 = vadd.xlane.f32.xlu0 %v1657
            %v1721 = vpop.xlane.xlu0 %1720
            %1722 = vadd.xlane.f32.xlu0 %v1659
            %v1723 = vpop.xlane.xlu0 %1722
            %1724 = vadd.xlane.f32.xlu0 %v1661
            %v1725 = vpop.xlane.xlu0 %1724
            %1726 = vadd.xlane.f32.xlu0 %v1663
            %v1727 = vpop.xlane.xlu0 %1726
            %1728 = vadd.xlane.f32.xlu0 %v1665
            %v1729 = vpop.xlane.xlu0 %1728
            %1730 = vadd.xlane.f32.xlu0 %v1667
            %v1731 = vpop.xlane.xlu0 %1730
            %1732 = vadd.xlane.f32.xlu0 %v1669
            %v1733 = vpop.xlane.xlu0 %1732
            %1734 = vadd.xlane.f32.xlu0 %v1671
            %v1735 = vpop.xlane.xlu0 %1734
            %1736 = vadd.xlane.f32.xlu0 %v1673
            %v1737 = vpop.xlane.xlu0 %1736
            %1738 = vadd.xlane.f32.xlu0 %v1675
            %v1739 = vpop.xlane.xlu0 %1738
            %1740 = vadd.xlane.f32.xlu0 %v1677
            %v1741 = vpop.xlane.xlu0 %1740
            %1742 = vadd.xlane.f32.xlu0 %v1679
            %v1743 = vpop.xlane.xlu0 %1742
            %1744 = vadd.xlane.f32.xlu0 %v1681
            %v1745 = vpop.xlane.xlu0 %1744
            %1746 = vadd.xlane.f32.xlu0 %v1683
            %v1747 = vpop.xlane.xlu0 %1746
            %1748 = vadd.xlane.f32.xlu0 %v1685
            %v1749 = vpop.xlane.xlu0 %1748
            %1750 = vadd.xlane.f32.xlu0 %v1687
            %v1751 = vpop.xlane.xlu0 %1750
            %v1752 = vlog2.pop %v1689
            %v1753 = vmul.f32 %v1752, 0.6931472
            %v1754 = vlog2.pop %v1691
            %v1755 = vmul.f32 %v1754, 0.6931472
            %v1756 = vlog2.pop %v1693
            %v1757 = vmul.f32 %v1756, 0.6931472
            %v1758 = vlog2.pop %v1695
            %v1759 = vmul.f32 %v1758, 0.6931472
            %v1760 = vlog2.pop %v1697
            %v1761 = vmul.f32 %v1760, 0.6931472
            %v1762 = vlog2.pop %v1699
            %v1763 = vmul.f32 %v1762, 0.6931472
            %v1764 = vlog2.pop %v1701
            %v1765 = vmul.f32 %v1764, 0.6931472
            %v1766 = vlog2.pop %v1703
            %v1767 = vmul.f32 %v1766, 0.6931472
            %v1768 = vlog2.pop %v1705
            %v1769 = vmul.f32 %v1768, 0.6931472
            %v1770 = vlog2.pop %v1707
            %v1771 = vmul.f32 %v1770, 0.6931472
            %v1772 = vlog2.pop %v1709
            %v1773 = vmul.f32 %v1772, 0.6931472
            %v1774 = vlog2.pop %v1711
            %v1775 = vmul.f32 %v1774, 0.6931472
            %v1776 = vlog2.pop %v1713
            %v1777 = vmul.f32 %v1776, 0.6931472
            %v1778 = vlog2.pop %v1715
            %v1779 = vmul.f32 %v1778, 0.6931472
            %v1780 = vlog2.pop %v1717
            %v1781 = vmul.f32 %v1780, 0.6931472
            %v1782 = vlog2.pop %v1719
            %v1783 = vmul.f32 %v1782, 0.6931472
            %v1784 = vlog2.pop %v1721
            %v1785 = vmul.f32 %v1784, 0.6931472
            %v1786 = vlog2.pop %v1723
            %v1787 = vmul.f32 %v1786, 0.6931472
            %v1788 = vlog2.pop %v1725
            %v1789 = vmul.f32 %v1788, 0.6931472
            %v1790 = vlog2.pop %v1727
            %v1791 = vmul.f32 %v1790, 0.6931472
            %v1792 = vlog2.pop %v1729
            %v1793 = vmul.f32 %v1792, 0.6931472
            %v1794 = vlog2.pop %v1731
            %v1795 = vmul.f32 %v1794, 0.6931472
            %v1796 = vlog2.pop %v1733
            %v1797 = vmul.f32 %v1796, 0.6931472
            %v1798 = vlog2.pop %v1735
            %v1799 = vmul.f32 %v1798, 0.6931472
            %v1800 = vlog2.pop %v1737
            %v1801 = vmul.f32 %v1800, 0.6931472
            %v1802 = vlog2.pop %v1739
            %v1803 = vmul.f32 %v1802, 0.6931472
            %v1804 = vlog2.pop %v1741
            %v1805 = vmul.f32 %v1804, 0.6931472
            %v1806 = vlog2.pop %v1743
            %v1807 = vmul.f32 %v1806, 0.6931472
            %v1808 = vlog2.pop %v1745
            %v1809 = vmul.f32 %v1808, 0.6931472
            %v1810 = vlog2.pop %v1747
            %v1811 = vmul.f32 %v1810, 0.6931472
            %v1812 = vlog2.pop %v1749
            %v1813 = vmul.f32 %v1812, 0.6931472
            %v1814 = vlog2.pop %v1751
            %v1815 = vmul.f32 %v1814, 0.6931472
            %v1816 = vsub.f32 %v1592, %v1753
            %v1817 = vsub.f32 %v1593, %v1755
            %v1818 = vsub.f32 %v1594, %v1757
            %v1819 = vsub.f32 %v1595, %v1759
            %v1820 = vsub.f32 %v1596, %v1761
            %v1821 = vsub.f32 %v1597, %v1763
            %v1822 = vsub.f32 %v1598, %v1765
            %v1823 = vsub.f32 %v1599, %v1767
            %v1824 = vsub.f32 %v1600, %v1769
            %v1825 = vsub.f32 %v1601, %v1771
            %v1826 = vsub.f32 %v1602, %v1773
            %v1827 = vsub.f32 %v1603, %v1775
            %v1828 = vsub.f32 %v1604, %v1777
            %v1829 = vsub.f32 %v1605, %v1779
            %v1830 = vsub.f32 %v1606, %v1781
            %v1831 = vsub.f32 %v1607, %v1783
            %v1832 = vsub.f32 %v1608, %v1785
            %v1833 = vsub.f32 %v1609, %v1787
            %v1834 = vsub.f32 %v1610, %v1789
            %v1835 = vsub.f32 %v1611, %v1791
            %v1836 = vsub.f32 %v1612, %v1793
            %v1837 = vsub.f32 %v1613, %v1795
            %v1838 = vsub.f32 %v1614, %v1797
            %v1839 = vsub.f32 %v1615, %v1799
            %v1840 = vsub.f32 %v1616, %v1801
            %v1841 = vsub.f32 %v1617, %v1803
            %v1842 = vsub.f32 %v1618, %v1805
            %v1843 = vsub.f32 %v1619, %v1807
            %v1844 = vsub.f32 %v1620, %v1809
            %v1845 = vsub.f32 %v1621, %v1811
            %v1846 = vsub.f32 %v1622, %v1813
            %v1847 = vsub.f32 %v1623, %v1815
            %v1848 = vpack.c.bf16 %v1817, %v1816
            %v1849 = vpack.c.bf16 %v1819, %v1818
            %v1850 = vpack.c.bf16 %v1821, %v1820
            %v1851 = vpack.c.bf16 %v1823, %v1822
            %v1852 = vpack.c.bf16 %v1825, %v1824
            %v1853 = vpack.c.bf16 %v1827, %v1826
            %v1854 = vpack.c.bf16 %v1829, %v1828
            %v1855 = vpack.c.bf16 %v1831, %v1830
            %v1856 = vpack.c.bf16 %v1833, %v1832
            %v1857 = vpack.c.bf16 %v1835, %v1834
            %v1858 = vpack.c.bf16 %v1837, %v1836
            %v1859 = vpack.c.bf16 %v1839, %v1838
            %v1860 = vpack.c.bf16 %v1841, %v1840
            %v1861 = vpack.c.bf16 %v1843, %v1842
            %v1862 = vpack.c.bf16 %v1845, %v1844
            %v1863 = vpack.c.bf16 %v1847, %v1846
            %v1880 = vunpack.c.l.b16 %v1848
            %v1881 = vunpack.c.h.b16 %v1848
            %v1882 = vunpack.c.l.b16 %v1849
            %v1883 = vunpack.c.h.b16 %v1849
            %v1884 = vunpack.c.l.b16 %v1850
            %v1885 = vunpack.c.h.b16 %v1850
            %v1886 = vunpack.c.l.b16 %v1851
            %v1887 = vunpack.c.h.b16 %v1851
            %v1888 = vunpack.c.l.b16 %v1852
            %v1889 = vunpack.c.h.b16 %v1852
            %v1890 = vunpack.c.l.b16 %v1853
            %v1891 = vunpack.c.h.b16 %v1853
            %v1892 = vunpack.c.l.b16 %v1854
            %v1893 = vunpack.c.h.b16 %v1854
            %v1894 = vunpack.c.l.b16 %v1855
            %v1895 = vunpack.c.h.b16 %v1855
            %v1896 = vunpack.c.l.b16 %v1856
            %v1897 = vunpack.c.h.b16 %v1856
            %v1898 = vunpack.c.l.b16 %v1857
            %v1899 = vunpack.c.h.b16 %v1857
            %v1900 = vunpack.c.l.b16 %v1858
            %v1901 = vunpack.c.h.b16 %v1858
            %v1902 = vunpack.c.l.b16 %v1859
            %v1903 = vunpack.c.h.b16 %v1859
            %v1904 = vunpack.c.l.b16 %v1860
            %v1905 = vunpack.c.h.b16 %v1860
            %v1906 = vunpack.c.l.b16 %v1861
            %v1907 = vunpack.c.h.b16 %v1861
            %v1908 = vunpack.c.l.b16 %v1862
            %v1909 = vunpack.c.h.b16 %v1862
            %v1910 = vunpack.c.l.b16 %v1863
            %v1911 = vunpack.c.h.b16 %v1863
            %v1912 = vpack.c.b16 %v1880, %v1880
            %v1913 = vpack.c.b16 %v1881, %v1881
            %v1914 = vpack.c.b16 %v1882, %v1882
            %v1915 = vpack.c.b16 %v1883, %v1883
            %v1916 = vpack.c.b16 %v1884, %v1884
            %v1917 = vpack.c.b16 %v1885, %v1885
            %v1918 = vpack.c.b16 %v1886, %v1886
            %v1919 = vpack.c.b16 %v1887, %v1887
            %v1920 = vpack.c.b16 %v1888, %v1888
            %v1921 = vpack.c.b16 %v1889, %v1889
            %v1922 = vpack.c.b16 %v1890, %v1890
            %v1923 = vpack.c.b16 %v1891, %v1891
            %v1924 = vpack.c.b16 %v1892, %v1892
            %v1925 = vpack.c.b16 %v1893, %v1893
            %v1926 = vpack.c.b16 %v1894, %v1894
            %v1927 = vpack.c.b16 %v1895, %v1895
            %v1928 = vpack.c.b16 %v1896, %v1896
            %v1929 = vpack.c.b16 %v1897, %v1897
            %v1930 = vpack.c.b16 %v1898, %v1898
            %v1931 = vpack.c.b16 %v1899, %v1899
            %v1932 = vpack.c.b16 %v1900, %v1900
            %v1933 = vpack.c.b16 %v1901, %v1901
            %v1934 = vpack.c.b16 %v1902, %v1902
            %v1935 = vpack.c.b16 %v1903, %v1903
            %v1936 = vpack.c.b16 %v1904, %v1904
            %v1937 = vpack.c.b16 %v1905, %v1905
            %v1938 = vpack.c.b16 %v1906, %v1906
            %v1939 = vpack.c.b16 %v1907, %v1907
            %v1940 = vpack.c.b16 %v1908, %v1908
            %v1941 = vpack.c.b16 %v1909, %v1909
            %v1942 = vpack.c.b16 %v1910, %v1910
            %v1943 = vpack.c.b16 %v1911, %v1911
            %1976 = vst [vmem:[#allocation5] sm:$0xf] %v1912
            %1977 = vst [vmem:[#allocation5 + $0x4] sm:$0xf] %v1913
            %1978 = vst [vmem:[#allocation5 + $0x8] sm:$0xf] %v1914
            %1979 = vst [vmem:[#allocation5 + $0xc] sm:$0xf] %v1915
            %1980 = vst [vmem:[#allocation5 + $0x10] sm:$0xf] %v1916
            %1981 = vst [vmem:[#allocation5 + $0x14] sm:$0xf] %v1917
            %1982 = vst [vmem:[#allocation5 + $0x18] sm:$0xf] %v1918
            %1983 = vst [vmem:[#allocation5 + $0x1c] sm:$0xf] %v1919
            %1984 = vst [vmem:[#allocation5 + $0x20] sm:$0xf] %v1920
            %1985 = vst [vmem:[#allocation5 + $0x24] sm:$0xf] %v1921
            %1986 = vst [vmem:[#allocation5 + $0x28] sm:$0xf] %v1922
            %1987 = vst [vmem:[#allocation5 + $0x2c] sm:$0xf] %v1923
            %1988 = vst [vmem:[#allocation5 + $0x30] sm:$0xf] %v1924
            %1989 = vst [vmem:[#allocation5 + $0x34] sm:$0xf] %v1925
            %1990 = vst [vmem:[#allocation5 + $0x38] sm:$0xf] %v1926
            %1991 = vst [vmem:[#allocation5 + $0x3c] sm:$0xf] %v1927
            %1992 = vst [vmem:[#allocation5 + $0x40] sm:$0xf] %v1928
            %1993 = vst [vmem:[#allocation5 + $0x44] sm:$0xf] %v1929
            %1994 = vst [vmem:[#allocation5 + $0x48] sm:$0xf] %v1930
            %1995 = vst [vmem:[#allocation5 + $0x4c] sm:$0xf] %v1931
            %1996 = vst [vmem:[#allocation5 + $0x50] sm:$0xf] %v1932
            %1997 = vst [vmem:[#allocation5 + $0x54] sm:$0xf] %v1933
            %1998 = vst [vmem:[#allocation5 + $0x58] sm:$0xf] %v1934
            %1999 = vst [vmem:[#allocation5 + $0x5c] sm:$0xf] %v1935
            %2000 = vst [vmem:[#allocation5 + $0x60] sm:$0xf] %v1936
            %2001 = vst [vmem:[#allocation5 + $0x64] sm:$0xf] %v1937
            %2002 = vst [vmem:[#allocation5 + $0x68] sm:$0xf] %v1938
            %2003 = vst [vmem:[#allocation5 + $0x6c] sm:$0xf] %v1939
            %2004 = vst [vmem:[#allocation5 + $0x70] sm:$0xf] %v1940
            %2005 = vst [vmem:[#allocation5 + $0x74] sm:$0xf] %v1941
            %2006 = vst [vmem:[#allocation5 + $0x78] sm:$0xf] %v1942
            %2007 = vst [vmem:[#allocation5 + $0x7c] sm:$0xf] %v1943
          $region128: #{tpu_custom_call.1} parent=119 // pred_fallthru
            _
        $region120: #{tpu_custom_call.1} parent=69 // pred_fallthru
          _
        // Predicated region
        $region129: #{tpu_custom_call.1} parent=69 // pred_check
          %p2008 = pneg %p148
        $region130: #{tpu_custom_call.1} parent=69 // pred_check_branch
          %2010 = sbr.rel (%p2008) target = $region132
        $region131: #{tpu_custom_call.1} parent=69 // pred_region
          %s2012 = ssub.s32 2048, 2048
          %2013 = vsyncadd [#allocation6], %s2012
          %s2014 = sshll.u32 [#allocation5], 4
          %s2015 = int_to_ptr.vmem [resolvable:$true] %s2014
          %2020 = dma.vmem_to_hbm [thread:$0]  %s2015, 2048, %s5, [#allocation6], 64, 64, 4
        $region132: #{tpu_custom_call.1} parent=69 // pred_fallthru
          _
        // Predicated region
        $region133: #{tpu_custom_call.1} parent=69 // pred_check
          %p2021 = pneg %p148
        $region134: #{tpu_custom_call.1} parent=69 // pred_check_branch
          %2023 = sbr.rel (%p2021) target = $region136
        $region135: #{tpu_custom_call.1} parent=69 // pred_region
          %2024 = dma.done [#allocation6], 2048
        $region136: #{tpu_custom_call.1} parent=69 // pred_fallthru
          _
      $region70: #{tpu_custom_call.1} parent=5 // pred_fallthru
        _
      %p2025 = scmp.le.s32.totalorder 2, %s12
      // Predicated region
      $region137: #{tpu_custom_call.1} parent=5 // pred_check
        %p2026 = pneg %p2025
      $region138: #{tpu_custom_call.1} parent=5 // pred_check_branch
        %2028 = sbr.rel (%p2026) target = $region140
      $region139: #{tpu_custom_call.1} parent=5 // pred_region
        %s2029 = ssub.s32 %s12, 2
      $region140: #{tpu_custom_call.1} parent=5 // pred_fallthru
        _
    $region6: #{tpu_custom_call.1} parent=1 // loop_footer
      %s16 = sadd.s32 1, %s12
    $region7: #{tpu_custom_call.1} parent=1 // loop_footer_branch
      %11 = sbr.rel target = $region3
    $region8: #{tpu_custom_call.1} parent=1 // loop_exit
      _
    %2030 = vsyncpa [#allocation6], 1
    %s2031 = scalar_lea.sflag [#allocation6], 1
    %2032 = vsyncpa %s2031, 1
  %2033 = vsyncmov [#allocation3]
  %s2034 = vpop.sfrf %2033
  %p2035 = scmp.eq.s32.totalorder %s2034, 0
  %p2036 = pneg %p2035
  %2038 = shalt.err (%p2036)

</llo_original>
